<compile_context>
chip_gen: v5e
topology: v5e:2x2
jax: 0.10.0
libtpu: 0.0.40
codegen_flags: <defaults>
</compile_context>

<pallas_src>
import functools
import math

import jax
import jax.numpy as jnp
from jax.experimental import pallas as pl
from jax.experimental.pallas import tpu as pltpu


def _round_up(x, m):
    return (x + m - 1) // m * m


def _pick_div_tile(total, desired, mult):
    """Largest multiple of `mult` that divides `total` and is <= `desired`.

    Falls back to `total` (full extent) when no such divisor exists or when
    total <= desired.
    """
    if total <= desired:
        return total
    d = (desired // mult) * mult
    while d >= mult:
        if total % d == 0:
            return d
        d -= mult
    return total


def _vmem_limit_bytes():
    """Generation-aware scoped-VMEM limit with headroom (v5e/v6e: ~108 MiB,
    v7x: ~54 MiB); conservative 54 MiB fallback if the query fails."""
    cap = None
    try:
        info = pltpu.get_tpu_info()
        for name in ("vmem_capacity_bytes", "vmem_size_bytes", "vmem_bytes"):
            cap = getattr(info, name, None)
            if cap:
                break
    except Exception:
        cap = None
    if not cap or cap <= 0:
        cap = 64 * 1024 * 1024
    return int(min(int(cap * 0.85), 112 * 1024 * 1024))


def _layernorm_f32(x, g, b, eps=1e-5):
    x = x.astype(jnp.float32)
    mu = jnp.mean(x, axis=-1, keepdims=True)
    xc = x - mu
    var = jnp.mean(xc * xc, axis=-1, keepdims=True)
    return xc * jax.lax.rsqrt(var + eps) * g + b


# --------------------------------------------------------------------------
# Kernel 1: qkv = LayerNorm(x; g1,b1) @ W_attn + b_attn
#   grid = (row tiles [parallel], output-column tiles [arbitrary])
#   LayerNorm cached in a (tm, C) scratch at j == 0 (bounded weight residency)
# --------------------------------------------------------------------------
def _ln_qkv_kernel(x_ref, g_ref, b_ref, w_ref, bias_ref, o_ref, ln_sc):
    @pl.when(pl.program_id(1) == 0)
    def _():
        ln_sc[...] = _layernorm_f32(x_ref[...], g_ref[...],
                                    b_ref[...]).astype(ln_sc.dtype)

    y = jnp.dot(ln_sc[...], w_ref[...],
                preferred_element_type=jnp.float32) + bias_ref[...]
    o_ref[...] = y.astype(o_ref.dtype)


def _ln_qkv(x2, g, b, w, bias, *, tm, tn, compute_dtype, vmem_limit):
    Mp, C = x2.shape
    N = w.shape[1]
    return pl.pallas_call(
        _ln_qkv_kernel,
        out_shape=jax.ShapeDtypeStruct((Mp, N), compute_dtype),
        grid_spec=pltpu.PrefetchScalarGridSpec(
            num_scalar_prefetch=0,
            grid=(Mp // tm, N // tn),
            in_specs=[
                pl.BlockSpec((tm, C), lambda i, j: (i, 0)),
                pl.BlockSpec((1, C), lambda i, j: (0, 0)),
                pl.BlockSpec((1, C), lambda i, j: (0, 0)),
                pl.BlockSpec((C, tn), lambda i, j: (0, j)),
                pl.BlockSpec((1, tn), lambda i, j: (0, j)),
            ],
            out_specs=pl.BlockSpec((tm, tn), lambda i, j: (i, j)),
            scratch_shapes=[pltpu.VMEM((tm, C), compute_dtype)],
        ),
        compiler_params=pltpu.CompilerParams(
            dimension_semantics=("parallel", "arbitrary"),
            vmem_limit_bytes=vmem_limit),
    )(x2, g, b, w, bias)


# --------------------------------------------------------------------------
# Kernel 2: causal flash attention reading Q/K/V column slabs of (B, T, 3C)
#   grid = (batch [parallel], q tiles [parallel], kv tiles [arbitrary, last])
#   heads handled by a static in-kernel loop; output (B, T, C) lane-dense.
# --------------------------------------------------------------------------
def _flash_attn_kernel(q_ref, k_ref, v_ref, o_ref, m_sc, l_sc, acc_sc,
                       *, n_head, scale, seq_len):
    tq = q_ref.shape[1]
    tk = k_ref.shape[1]
    C = q_ref.shape[2]
    hd = C // n_head
    qi = pl.program_id(1)
    ki = pl.program_id(2)

    @pl.when(ki == 0)
    def _():
        m_sc[...] = jnp.full_like(m_sc, -jnp.inf)
        l_sc[...] = jnp.zeros_like(l_sc)
        acc_sc[...] = jnp.zeros_like(acc_sc)

    # Compute only for kv tiles that intersect the causal lower triangle.
    # (Tiles strictly above the diagonal are never DMA'd either — see the
    #  clamped index maps in _flash_attention.)
    @pl.when(ki * tk <= qi * tq + (tq - 1))
    def _():
        q_pos = qi * tq + jax.lax.broadcasted_iota(jnp.int32, (tq, tk), 0)
        k_pos = ki * tk + jax.lax.broadcasted_iota(jnp.int32, (tq, tk), 1)
        mask = (k_pos <= q_pos) & (k_pos < seq_len)

        for h in range(n_head):
            lo, hi = h * hd, (h + 1) * hd
            qh = q_ref[0, :, lo:hi]                    # (tq, hd) bf16
            kh = k_ref[0, :, lo:hi]                    # (tk, hd) bf16
            vh = v_ref[0, :, lo:hi]                    # (tk, hd) bf16
            s = jax.lax.dot_general(
                qh, kh, (((1,), (1,)), ((), ())),
                preferred_element_type=jnp.float32) * scale
            s = jnp.where(mask, s, -jnp.inf)
            m_prev = m_sc[:, h:h + 1]
            m_new = jnp.maximum(m_prev, s.max(axis=-1, keepdims=True))
            alpha = jnp.exp(m_prev - m_new)
            p = jnp.exp(s - m_new)
            l_sc[:, h:h + 1] = alpha * l_sc[:, h:h + 1] + p.sum(axis=-1,
                                                                keepdims=True)
            acc_sc[:, lo:hi] = alpha * acc_sc[:, lo:hi] + jnp.dot(
                p.astype(vh.dtype), vh, preferred_element_type=jnp.float32)
            m_sc[:, h:h + 1] = m_new

    @pl.when(ki == pl.num_programs(2) - 1)
    def _():
        # approx reciprocal (~1e-3 rel err) is within test tolerance; swap to
        # exact division for production if needed.
        inv_l = pl.reciprocal(l_sc[...], approx=True)  # (tq, n_head)
        for h in range(n_head):
            lo, hi = h * hd, (h + 1) * hd
            o_ref[0, :, lo:hi] = (acc_sc[:, lo:hi] *
                                  inv_l[:, h:h + 1]).astype(o_ref.dtype)


def _flash_attention(qkv3, *, n_head, t_att, vmem_limit, out_dtype):
    B, T, threeC = qkv3.shape
    C = threeC // 3
    hd = C // n_head
    scale = 1.0 / math.sqrt(hd)
    qn = T // t_att
    kn = T // t_att
    kernel = functools.partial(_flash_attn_kernel, n_head=n_head,
                               scale=scale, seq_len=T)
    return pl.pallas_call(
        kernel,
        out_shape=jax.ShapeDtypeStruct((B, T, C), out_dtype),
        grid_spec=pltpu.PrefetchScalarGridSpec(
            num_scalar_prefetch=0,
            grid=(B, qn, kn),
            in_specs=[
                # q: column block 0; k/v: column blocks 1/2, kv row clamped to
                # the causal bound so fully-masked tiles are never re-fetched.
                pl.BlockSpec((1, t_att, C), lambda b, qi, ki: (b, qi, 0)),
                pl.BlockSpec((1, t_att, C),
                             lambda b, qi, ki: (b, jnp.minimum(ki, qi), 1)),
                pl.BlockSpec((1, t_att, C),
                             lambda b, qi, ki: (b, jnp.minimum(ki, qi), 2)),
            ],
            out_specs=pl.BlockSpec((1, t_att, C), lambda b, qi, ki: (b, qi, 0)),
            scratch_shapes=[
                pltpu.VMEM((t_att, n_head), jnp.float32),   # running max m
                pltpu.VMEM((t_att, n_head), jnp.float32),   # running sum l
                pltpu.VMEM((t_att, C), jnp.float32),        # output accumulator
            ],
        ),
        compiler_params=pltpu.CompilerParams(
            dimension_semantics=("parallel", "parallel", "arbitrary"),
            vmem_limit_bytes=vmem_limit),
    )(qkv3, qkv3, qkv3)


# --------------------------------------------------------------------------
# Kernel 3 (fused): out = x1 + c_proj(GELU_tanh(c_fc(LayerNorm(x1; g2,b2))))
#   with x1 = x + y @ W_attnproj + b_attnproj computed in-kernel at j == 0.
#   grid = (row tiles [parallel], hidden tiles [arbitrary, last])
# --------------------------------------------------------------------------
def _attn_proj_mlp_kernel(x_ref, y_ref, wap_ref, bap_ref, g_ref, b_ref,
                          wfc_ref, bfc_ref, wpr_ref, bpr_ref, o_ref,
                          x1_sc, ln_sc, acc_sc):
    j = pl.program_id(1)

    @pl.when(j == 0)
    def _():
        x1 = (x_ref[...].astype(jnp.float32)
              + jnp.dot(y_ref[...], wap_ref[...],
                        preferred_element_type=jnp.float32)
              + bap_ref[...])
        x1_sc[...] = x1
        ln_sc[...] = _layernorm_f32(x1, g_ref[...], b_ref[...]).astype(ln_sc.dtype)
        acc_sc[...] = jnp.zeros_like(acc_sc)

    # c_fc slab (tm, th) + bias + tanh-GELU in f32
    h = jnp.dot(ln_sc[...], wfc_ref[...],
                preferred_element_type=jnp.float32) + bfc_ref[...]
    c = 0.7978845608028654  # sqrt(2/pi)
    h = 0.5 * h * (1.0 + jnp.tanh(c * (h + 0.044715 * h * h * h)))
    # partial c_proj, accumulated over hidden tiles in f32
    acc_sc[...] += jnp.dot(h.astype(wpr_ref.dtype), wpr_ref[...],
                           preferred_element_type=jnp.float32)

    @pl.when(j == pl.num_programs(1) - 1)
    def _():
        o_ref[...] = (x1_sc[...] + acc_sc[...] + bpr_ref[...]).astype(o_ref.dtype)


def _attn_proj_mlp(x2, y2, w_ap, b_ap, g2, b2, w_fc, b_fc, w_pr, b_pr, *,
                   tm, th, compute_dtype, vmem_limit):
    Mp, C = x2.shape
    H = w_fc.shape[1]
    return pl.pallas_call(
        _attn_proj_mlp_kernel,
        out_shape=jax.ShapeDtypeStruct((Mp, C), x2.dtype),
        grid_spec=pltpu.PrefetchScalarGridSpec(
            num_scalar_prefetch=0,
            grid=(Mp // tm, H // th),
            in_specs=[
                pl.BlockSpec((tm, C), lambda i, j: (i, 0)),    # residual x
                pl.BlockSpec((tm, C), lambda i, j: (i, 0)),    # attn out y
                pl.BlockSpec((C, C), lambda i, j: (0, 0)),     # W_attnproj
                pl.BlockSpec((1, C), lambda i, j: (0, 0)),     # b_attnproj
                pl.BlockSpec((1, C), lambda i, j: (0, 0)),     # ln2 gamma
                pl.BlockSpec((1, C), lambda i, j: (0, 0)),     # ln2 beta
                pl.BlockSpec((C, th), lambda i, j: (0, j)),    # W_fc tile
                pl.BlockSpec((1, th), lambda i, j: (0, j)),    # b_fc tile
                pl.BlockSpec((th, C), lambda i, j: (j, 0)),    # W_proj tile
                pl.BlockSpec((1, C), lambda i, j: (0, 0)),     # b_proj
            ],
            out_specs=pl.BlockSpec((tm, C), lambda i, j: (i, 0)),
            scratch_shapes=[
                pltpu.VMEM((tm, C), jnp.float32),     # x1 (post-attn residual)
                pltpu.VMEM((tm, C), compute_dtype),   # cached ln_2(x1)
                pltpu.VMEM((tm, C), jnp.float32),     # c_proj accumulator
            ],
        ),
        compiler_params=pltpu.CompilerParams(
            dimension_semantics=("parallel", "arbitrary"),
            vmem_limit_bytes=vmem_limit),
    )(x2, y2, w_ap, b_ap, g2, b2, w_fc, b_fc, w_pr, b_pr)


# --------------------------------------------------------------------------
# Full Block forward
# --------------------------------------------------------------------------
def block_forward(x, params, n_head, *, tm=256, tn_qkv=1536, th=1024,
                  t_att=256, compute_dtype=jnp.bfloat16):
    """x: (B, T, C) f32.  Weights stored as (in, out) = PyTorch weight.T."""
    B, T, C = x.shape
    assert C % n_head == 0
    H = params['w_fc'].shape[1]
    cd = compute_dtype
    vl = _vmem_limit_bytes()

    w_attn = params['w_attn'].astype(cd)
    w_ap = params['w_attnproj'].astype(cd)
    w_fc = params['w_fc'].astype(cd)
    w_pr = params['w_proj'].astype(cd)

    g1 = params['ln1_g'].reshape(1, C).astype(jnp.float32)
    b1 = params['ln1_b'].reshape(1, C).astype(jnp.float32)
    g2 = params['ln2_g'].reshape(1, C).astype(jnp.float32)
    b2 = params['ln2_b'].reshape(1, C).astype(jnp.float32)
    b_attn = params['b_attn'].reshape(1, 3 * C).astype(jnp.float32)
    b_ap = params['b_attnproj'].reshape(1, C).astype(jnp.float32)
    b_fc = params['b_fc'].reshape(1, H).astype(jnp.float32)
    b_pr = params['b_proj'].reshape(1, C).astype(jnp.float32)

    # Tile selection (divisor-based -> no pad/slice copies at GPT-2 shapes).
    M = B * T
    tm = min(tm, _round_up(M, 8))
    Mp = _round_up(M, tm)                      # only pads when tm doesn't divide M
    tn = _pick_div_tile(3 * C, tn_qkv, 128)    # qkv output-column tile
    th = _pick_div_tile(H, th, 128)            # MLP hidden tile
    ta = _pick_div_tile(T, t_att, 8)           # attention q/kv tile (divides T)

    x2 = x.reshape(M, C).astype(jnp.float32)
    x2p = jnp.pad(x2, ((0, Mp - M), (0, 0))) if Mp != M else x2

    # ---- ln_1 + c_attn (qkv projection), output stays bf16 ----
    qkv = _ln_qkv(x2p, g1, b1, w_attn, b_attn,
                  tm=tm, tn=tn, compute_dtype=cd, vmem_limit=vl)   # (Mp, 3C)
    qkv3 = (qkv[:M] if Mp != M else qkv).reshape(B, T, 3 * C)

    # ---- causal flash attention directly over the qkv buffer ----
    y3 = _flash_attention(qkv3, n_head=n_head, t_att=ta,
                          vmem_limit=vl, out_dtype=cd)              # (B, T, C)
    y2 = y3.reshape(M, C)
    y2p = jnp.pad(y2, ((0, Mp - M), (0, 0))) if Mp != M else y2

    # ---- attn output projection + residual + ln_2 + MLP + residual ----
    out = _attn_proj_mlp(x2p, y2p, w_ap, b_ap, g2, b2, w_fc, b_fc, w_pr, b_pr,
                         tm=tm, th=th, compute_dtype=cd, vmem_limit=vl)

    return (out[:M] if Mp != M else out).reshape(B, T, C)


# --------------------------------------------------------------------------
# Pure-JAX f32 reference (mirrors the PyTorch Block forward)
# --------------------------------------------------------------------------
def block_reference(x, p, n_head):
    B, T, C = x.shape
    hd = C // n_head

    def ln(z, g, b):
        mu = z.mean(-1, keepdims=True)
        zc = z - mu
        var = (zc * zc).mean(-1, keepdims=True)
        return zc / jnp.sqrt(var + 1e-5) * g + b

    h = ln(x, p['ln1_g'], p['ln1_b'])
    qkv = h @ p['w_attn'] + p['b_attn']
    q, k, v = jnp.split(qkv, 3, axis=-1)

    def heads(t):
        return t.reshape(B, T, n_head, hd).transpose(0, 2, 1, 3)

    q, k, v = heads(q), heads(k), heads(v)
    s = (q @ k.transpose(0, 1, 3, 2)) / math.sqrt(hd)
    mask = jnp.tril(jnp.ones((T, T), dtype=bool))
    s = jnp.where(mask, s, -jnp.inf)
    a = jax.nn.softmax(s, axis=-1)
    y = (a @ v).transpose(0, 2, 1, 3).reshape(B, T, C)
    x = x + y @ p['w_attnproj'] + p['b_attnproj']

    h = ln(x, p['ln2_g'], p['ln2_b'])
    h1 = h @ p['w_fc'] + p['b_fc']
    c = 0.7978845608028654
    h1 = 0.5 * h1 * (1.0 + jnp.tanh(c * (h1 + 0.044715 * h1 ** 3)))
    return x + h1 @ p['w_proj'] + p['b_proj']


if __name__ == "__main__":
    # Scaled-down GPTConfig: n_embd=128 (lane-dense), n_head=4, T=128, B=2
    B, T, C, n_head = 2, 128, 128, 4
    H = 4 * C

    key = jax.random.PRNGKey(0)
    keys = jax.random.split(key, 13)

    x = jax.random.normal(keys[0], (B, T, C), dtype=jnp.float32)

    def linear_init(kw, kb, fan_in, shape_w, shape_b):
        bound = 1.0 / math.sqrt(fan_in)
        w = jax.random.uniform(kw, shape_w, jnp.float32, -bound, bound)
        b = jax.random.uniform(kb, shape_b, jnp.float32, -bound, bound)
        return w, b

    w_attn, b_attn = linear_init(keys[1], keys[2], C, (C, 3 * C), (3 * C,))
    w_attnproj, b_attnproj = linear_init(keys[3], keys[4], C, (C, C), (C,))
    w_fc, b_fc = linear_init(keys[5], keys[6], C, (C, H), (H,))
    w_proj, b_proj = linear_init(keys[7], keys[8], H, (H, C), (C,))

    params = dict(
        ln1_g=1.0 + 0.1 * jax.random.normal(keys[9], (C,), jnp.float32),
        ln1_b=0.1 * jax.random.normal(keys[10], (C,), jnp.float32),
        ln2_g=1.0 + 0.1 * jax.random.normal(keys[11], (C,), jnp.float32),
        ln2_b=0.1 * jax.random.normal(keys[12], (C,), jnp.float32),
        w_attn=w_attn, b_attn=b_attn,
        w_attnproj=w_attnproj, b_attnproj=b_attnproj,
        w_fc=w_fc, b_fc=b_fc, w_proj=w_proj, b_proj=b_proj,
    )

    y = block_forward(x, params, n_head)
    jax.block_until_ready(y)

    y_ref = block_reference(x, params, n_head)
    assert y.shape == (B, T, C)
    max_err = float(jnp.max(jnp.abs(y - y_ref)))
    # bf16 matmul inputs / f32 accumulation vs pure-f32 reference
    assert jnp.allclose(y, y_ref, atol=5e-2, rtol=5e-2), \
        f"mismatch vs reference (max abs err {max_err})"

    print("KERNEL_OK")
</pallas_src>

<mosaic_0001>
module attributes {stable_mosaic.version = 11 : i64} {
  func.func @_ln_qkv_kernel(%arg0: i32, %arg1: i32, %arg2: memref<256x128xf32, #tpu.memory_space<vmem>>, %arg3: memref<1x128xf32, #tpu.memory_space<vmem>>, %arg4: memref<1x128xf32, #tpu.memory_space<vmem>>, %arg5: memref<128x384xbf16, #tpu.memory_space<vmem>>, %arg6: memref<1x384xf32, #tpu.memory_space<vmem>>, %arg7: memref<256x384xbf16, #tpu.memory_space<vmem>>, %arg8: memref<256x128xbf16, #tpu.memory_space<vmem>>) attributes {dimension_semantics = [#tpu.dimension_semantics<parallel>, #tpu.dimension_semantics<arbitrary>], iteration_bounds = array<i64: 1, 1>, scalar_prefetch = 0 : i64, scratch_operands = 1 : i64, tpu.core_type = #tpu.core_type<tc>, window_params = [{transform_indices = @transform_0, window_bounds = array<i64: 256, 128>}, {pipeline_mode = #tpu.pipeline_mode<synchronous>, transform_indices = @transform_1, window_bounds = array<i64: 1, 128>}, {pipeline_mode = #tpu.pipeline_mode<synchronous>, transform_indices = @transform_2, window_bounds = array<i64: 1, 128>}, {transform_indices = @transform_3, window_bounds = array<i64: 128, 384>}, {transform_indices = @transform_4, window_bounds = array<i64: 1, 384>}, {transform_indices = @transform_5, window_bounds = array<i64: 256, 384>}]} {
    %c0_i32 = arith.constant 0 : i32
    %0 = arith.cmpi eq, %arg1, %c0_i32 : i32
    %1 = arith.extui %0 : i1 to i32
    %c0_i32_0 = arith.constant 0 : i32
    %2 = arith.cmpi ne, %1, %c0_i32_0 : i32
    scf.if %2 {
      %c0_8 = arith.constant 0 : index
      %c0_9 = arith.constant 0 : index
      %11 = vector.load %arg2[%c0_8, %c0_9] : memref<256x128xf32, #tpu.memory_space<vmem>>, vector<256x128xf32>
      %c0_10 = arith.constant 0 : index
      %c0_11 = arith.constant 0 : index
      %12 = vector.load %arg3[%c0_10, %c0_11] : memref<1x128xf32, #tpu.memory_space<vmem>>, vector<1x128xf32>
      %c0_12 = arith.constant 0 : index
      %c0_13 = arith.constant 0 : index
      %13 = vector.load %arg4[%c0_12, %c0_13] : memref<1x128xf32, #tpu.memory_space<vmem>>, vector<1x128xf32>
      %cst_14 = arith.constant dense<0.000000e+00> : vector<256xf32>
      %14 = vector.multi_reduction <add>, %11, %cst_14 [1] : vector<256x128xf32> to vector<256xf32>
      %15 = vector.shape_cast %14 : vector<256xf32> to vector<256x1xf32>
      %cst_15 = arith.constant 1.280000e+02 : f32
      %16 = vector.broadcast %cst_15 : f32 to vector<256x1xf32>
      %17 = arith.divf %15, %16 : vector<256x1xf32>
      %18 = vector.broadcast %17 : vector<256x1xf32> to vector<256x128xf32>
      %19 = arith.subf %11, %18 : vector<256x128xf32>
      %20 = arith.mulf %19, %19 : vector<256x128xf32>
      %cst_16 = arith.constant dense<0.000000e+00> : vector<256xf32>
      %21 = vector.multi_reduction <add>, %20, %cst_16 [1] : vector<256x128xf32> to vector<256xf32>
      %22 = vector.shape_cast %21 : vector<256xf32> to vector<256x1xf32>
      %cst_17 = arith.constant 1.280000e+02 : f32
      %23 = vector.broadcast %cst_17 : f32 to vector<256x1xf32>
      %24 = arith.divf %22, %23 : vector<256x1xf32>
      %cst_18 = arith.constant 9.99999974E-6 : f32
      %25 = vector.broadcast %cst_18 : f32 to vector<256x1xf32>
      %26 = arith.addf %24, %25 : vector<256x1xf32>
      %27 = math.rsqrt %26 : vector<256x1xf32>
      %28 = vector.broadcast %27 : vector<256x1xf32> to vector<256x128xf32>
      %29 = arith.mulf %19, %28 : vector<256x128xf32>
      %30 = vector.broadcast %12 : vector<1x128xf32> to vector<256x128xf32>
      %31 = arith.mulf %29, %30 : vector<256x128xf32>
      %32 = vector.broadcast %13 : vector<1x128xf32> to vector<256x128xf32>
      %33 = arith.addf %31, %32 : vector<256x128xf32>
      %34 = arith.truncf %33 : vector<256x128xf32> to vector<256x128xbf16>
      %c0_19 = arith.constant 0 : index
      %c0_20 = arith.constant 0 : index
      %35 = vector.load %arg8[%c0_19, %c0_20] : memref<256x128xbf16, #tpu.memory_space<vmem>>, vector<256x128xbf16>
      tpu.vector_store %arg8[%c0_19, %c0_20], %34 {strides = array<i32>} : memref<256x128xbf16, #tpu.memory_space<vmem>>, vector<256x128xbf16>,
    } else {
    }
    %c0 = arith.constant 0 : index
    %c0_1 = arith.constant 0 : index
    %3 = vector.load %arg8[%c0, %c0_1] : memref<256x128xbf16, #tpu.memory_space<vmem>>, vector<256x128xbf16>
    %c0_2 = arith.constant 0 : index
    %c0_3 = arith.constant 0 : index
    %4 = vector.load %arg5[%c0_2, %c0_3] : memref<128x384xbf16, #tpu.memory_space<vmem>>, vector<128x384xbf16>
    %cst = arith.constant dense<0.000000e+00> : vector<256x384xf32>
    %5 = tpu.matmul %3, %4, %cst {dimension_numbers = #tpu.dot_dimension_numbers<[1], [0], [0], [1], [0, 0, 1, 1], [], []>} : vector<256x128xbf16>, vector<128x384xbf16>, vector<256x384xf32> -> vector<256x384xf32>
    %c0_4 = arith.constant 0 : index
    %c0_5 = arith.constant 0 : index
    %6 = vector.load %arg6[%c0_4, %c0_5] : memref<1x384xf32, #tpu.memory_space<vmem>>, vector<1x384xf32>
    %7 = vector.broadcast %6 : vector<1x384xf32> to vector<256x384xf32>
    %8 = arith.addf %5, %7 : vector<256x384xf32>
    %9 = arith.truncf %8 : vector<256x384xf32> to vector<256x384xbf16>
    %c0_6 = arith.constant 0 : index
    %c0_7 = arith.constant 0 : index
    %10 = vector.load %arg7[%c0_6, %c0_7] : memref<256x384xbf16, #tpu.memory_space<vmem>>, vector<256x384xbf16>
    tpu.vector_store %arg7[%c0_6, %c0_7], %9 {strides = array<i32>} : memref<256x384xbf16, #tpu.memory_space<vmem>>, vector<256x384xbf16>,
    return
  }
  func.func @transform_0(%arg0: i32, %arg1: i32) -> (i32, i32) {
    %c0_i32 = arith.constant 0 : i32
    %c0_i32_0 = arith.constant 0 : i32
    return %arg0, %c0_i32 : i32, i32
  }
  func.func @transform_1(%arg0: i32, %arg1: i32) -> (i32, i32) {
    %c0_i32 = arith.constant 0 : i32
    %c0_i32_0 = arith.constant 0 : i32
    %c0_i32_1 = arith.constant 0 : i32
    return %c0_i32, %c0_i32_0 : i32, i32
  }
  func.func @transform_2(%arg0: i32, %arg1: i32) -> (i32, i32) {
    %c0_i32 = arith.constant 0 : i32
    %c0_i32_0 = arith.constant 0 : i32
    %c0_i32_1 = arith.constant 0 : i32
    return %c0_i32, %c0_i32_0 : i32, i32
  }
  func.func @transform_3(%arg0: i32, %arg1: i32) -> (i32, i32) {
    %c0_i32 = arith.constant 0 : i32
    %c0_i32_0 = arith.constant 0 : i32
    return %c0_i32, %arg1 : i32, i32
  }
  func.func @transform_4(%arg0: i32, %arg1: i32) -> (i32, i32) {
    %c0_i32 = arith.constant 0 : i32
    %c0_i32_0 = arith.constant 0 : i32
    return %c0_i32, %arg1 : i32, i32
  }
  func.func @transform_5(%arg0: i32, %arg1: i32) -> (i32, i32) {
    %c0_i32 = arith.constant 0 : i32
    return %arg0, %arg1 : i32, i32
  }
}

</mosaic_0001>

<llo_original>
// kernel: tpu_custom_call.1
$region0: #{tpu_custom_call.1}
  #allocation0 [shape = 'u32[]', space=smem, size = 0x4, offset = 0x4, fixed_abs, tag = 'smem constant byte address 0x4 - core index']
  #allocation1 [shape = 'u32[72,128]{1,0:T(1,128)}', space=vmem, size = 0x9000, scoped, tag = 'internal scratch']
  #allocation2 [shape = 'bf16[256,128]{1,0:T(8,128)(2,1)}', space=vmem, size = 0x10000, scoped, tag = 'scratch operand']
  %s0 = inlined_call_operand.hbm [shape: f32[256,128], index: 0, kind: input, shape index: {}]
  %s1 = inlined_call_operand.hbm [shape: f32[1,128], index: 1, kind: input, shape index: {}]
  %s2 = inlined_call_operand.hbm [shape: f32[1,128], index: 2, kind: input, shape index: {}]
  %s3 = inlined_call_operand.hbm [shape: bf16[128,384], index: 3, kind: input, shape index: {}]
  %s4 = inlined_call_operand.vmem [shape: f32[1,384], index: 4, kind: input, shape index: {}]
  %s5 = inlined_call_operand.hbm [shape: bf16[256,384], index: 5, kind: output, shape index: {}]
  %s6 = sld [smem:[#allocation0]]
  $region50: #{tpu_custom_call.1} parent=0
    _
  %s8 = ssub.s32 1, %s6
  %s9 = scalar_select 0, %s8, %s6
  $region1: #{tpu_custom_call.1} parent=0
    #allocation3 [shape = 'u8[131072]{0}', space=vmem, size = 0x20000, scoped, tag = 'input window, operand 0, single buffered']
    #allocation4 [shape = 's32[1]{0}', space=sflag, size = 0x4, scoped, tag = 'scoped memory for tpu_custom_call.1']
    #allocation5 [shape = 's32[1]{0}', space=sflag, size = 0x4, scoped, tag = 'scoped memory for tpu_custom_call.1']
    #allocation6 [shape = 'u8[512]{0}', space=vmem, size = 0x400, scoped, tag = 'input window, operand 1, single buffered']
    #allocation7 [shape = 's32[1]{0}', space=sflag, size = 0x4, scoped, tag = 'scoped memory for tpu_custom_call.1']
    #allocation8 [shape = 'u8[512]{0}', space=vmem, size = 0x400, scoped, tag = 'input window, operand 2, single buffered']
    #allocation9 [shape = 'u8[98304]{0}', space=vmem, size = 0x18000, scoped, tag = 'input window, operand 3, single buffered']
    #allocation10 [shape = 's32[1]{0}', space=sflag, size = 0x4, scoped, tag = 'scoped memory for tpu_custom_call.1']
    #allocation11 [shape = 'u8[196608]{0}', space=vmem, size = 0x30000, scoped, tag = 'output window, operand 0, single buffered']
    %10 = vsyncpa [#allocation4], 0
    %11 = vsyncpa [#allocation7], 0
    %12 = vsyncpa [#allocation10], 0
    %13 = vsyncpa [#allocation5], 0
    // Predicated region
    $region2: #{tpu_custom_call.1} parent=1 // pred_check
      _
    $region3: #{tpu_custom_call.1} parent=1 // pred_check_branch
      %15 = sbr.rel (0) target = $region5
    $region4: #{tpu_custom_call.1} parent=1 // pred_region
      %17 = vsyncadd [#allocation4], 0
      %s18 = sshll.u32 %s0, 4
      %s19 = int_to_ptr.hbm [resolvable:$true] %s18
      %s20 = sshll.u32 [#allocation3], 4
      %s21 = int_to_ptr.vmem [resolvable:$true] %s20
      %26 = dma.hbm_to_vmem [thread:$0]  %s19, 4096, %s21, [#allocation4], 128, 128, 8
    $region5: #{tpu_custom_call.1} parent=1 // pred_fallthru
      _
    // Predicated region
    $region6: #{tpu_custom_call.1} parent=1 // pred_check
      _
    $region7: #{tpu_custom_call.1} parent=1 // pred_check_branch
      %28 = sbr.rel (0) target = $region9
    $region8: #{tpu_custom_call.1} parent=1 // pred_region
      %30 = vsyncadd [#allocation7], 0
      %s32 = sshll.u32 %s1, 4
      %s33 = int_to_ptr.hbm [resolvable:$true] %s32
      %s34 = sshll.u32 [#allocation6], 4
      %s35 = int_to_ptr.vmem [resolvable:$true] %s34
      %37 = dma.hbm_to_vmem [thread:$0]  %s33, 16, %s35, [#allocation7]
    $region9: #{tpu_custom_call.1} parent=1 // pred_fallthru
      _
    // Predicated region
    $region10: #{tpu_custom_call.1} parent=1 // pred_check
      _
    $region11: #{tpu_custom_call.1} parent=1 // pred_check_branch
      %39 = sbr.rel (0) target = $region13
    $region12: #{tpu_custom_call.1} parent=1 // pred_region
      %41 = vsyncadd [#allocation7], 0
      %s43 = sshll.u32 %s2, 4
      %s44 = int_to_ptr.hbm [resolvable:$true] %s43
      %s45 = sshll.u32 [#allocation8], 4
      %s46 = int_to_ptr.vmem [resolvable:$true] %s45
      %48 = dma.hbm_to_vmem [thread:$0]  %s44, 16, %s46, [#allocation7]
    $region13: #{tpu_custom_call.1} parent=1 // pred_fallthru
      _
    // Predicated region
    $region14: #{tpu_custom_call.1} parent=1 // pred_check
      _
    $region15: #{tpu_custom_call.1} parent=1 // pred_check_branch
      %50 = sbr.rel (0) target = $region17
    $region16: #{tpu_custom_call.1} parent=1 // pred_region
      %52 = vsyncadd [#allocation10], 0
      %s53 = sshll.u32 %s3, 4
      %s54 = int_to_ptr.hbm [resolvable:$true] %s53
      %s55 = sshll.u32 [#allocation9], 4
      %s56 = int_to_ptr.vmem [resolvable:$true] %s55
      %61 = dma.hbm_to_vmem [thread:$0]  %s54, 3072, %s56, [#allocation10], 192, 192, 12
    $region17: #{tpu_custom_call.1} parent=1 // pred_fallthru
      _
    // Predicated region
    $region18: #{tpu_custom_call.1} parent=1 // pred_check
      _
    $region19: #{tpu_custom_call.1} parent=1 // pred_check_branch
      %63 = sbr.rel (0) target = $region21
    $region20: #{tpu_custom_call.1} parent=1 // pred_region
      _
    $region21: #{tpu_custom_call.1} parent=1 // pred_fallthru
      _
    // Predicated region
    $region22: #{tpu_custom_call.1} parent=1 // pred_check
      _
    $region23: #{tpu_custom_call.1} parent=1 // pred_check_branch
      %65 = sbr.rel (0) target = $region25
    $region24: #{tpu_custom_call.1} parent=1 // pred_region
      %67 = dma.done [#allocation4], 4096
    $region25: #{tpu_custom_call.1} parent=1 // pred_fallthru
      _
    // Predicated region
    $region26: #{tpu_custom_call.1} parent=1 // pred_check
      _
    $region27: #{tpu_custom_call.1} parent=1 // pred_check_branch
      %69 = sbr.rel (0) target = $region29
    $region28: #{tpu_custom_call.1} parent=1 // pred_region
      %71 = dma.done [#allocation7], 16
    $region29: #{tpu_custom_call.1} parent=1 // pred_fallthru
      _
    // Predicated region
    $region30: #{tpu_custom_call.1} parent=1 // pred_check
      _
    $region31: #{tpu_custom_call.1} parent=1 // pred_check_branch
      %73 = sbr.rel (0) target = $region33
    $region32: #{tpu_custom_call.1} parent=1 // pred_region
      %75 = dma.done [#allocation7], 16
    $region33: #{tpu_custom_call.1} parent=1 // pred_fallthru
      _
    // Predicated region
    $region34: #{tpu_custom_call.1} parent=1 // pred_check
      _
    $region35: #{tpu_custom_call.1} parent=1 // pred_check_branch
      %77 = sbr.rel (0) target = $region37
    $region36: #{tpu_custom_call.1} parent=1 // pred_region
      %79 = dma.done [#allocation10], 3072
    $region37: #{tpu_custom_call.1} parent=1 // pred_fallthru
      _
    %p80 = scmp.eq.s32.totalorder 0, 0
    // Predicated region
    $region38: #{tpu_custom_call.1} parent=1 // pred_check
      %p81 = pneg %p80
    $region39: #{tpu_custom_call.1} parent=1 // pred_check_branch
      %83 = sbr.rel (%p81) target = $region41
    $region40: #{tpu_custom_call.1} parent=1 // pred_region
      %v84 = vld [vmem:[#allocation3] sm:$0xff]
      %v85 = vld [vmem:[#allocation3 + $0x8] sm:$0xff]
      %v86 = vld [vmem:[#allocation3 + $0x10] sm:$0xff]
      %v87 = vld [vmem:[#allocation3 + $0x18] sm:$0xff]
      %v88 = vld [vmem:[#allocation3 + $0x20] sm:$0xff]
      %v89 = vld [vmem:[#allocation3 + $0x28] sm:$0xff]
      %v90 = vld [vmem:[#allocation3 + $0x30] sm:$0xff]
      %v91 = vld [vmem:[#allocation3 + $0x38] sm:$0xff]
      %v92 = vld [vmem:[#allocation3 + $0x40] sm:$0xff]
      %v93 = vld [vmem:[#allocation3 + $0x48] sm:$0xff]
      %v94 = vld [vmem:[#allocation3 + $0x50] sm:$0xff]
      %v95 = vld [vmem:[#allocation3 + $0x58] sm:$0xff]
      %v96 = vld [vmem:[#allocation3 + $0x60] sm:$0xff]
      %v97 = vld [vmem:[#allocation3 + $0x68] sm:$0xff]
      %v98 = vld [vmem:[#allocation3 + $0x70] sm:$0xff]
      %v99 = vld [vmem:[#allocation3 + $0x78] sm:$0xff]
      %v100 = vld [vmem:[#allocation3 + $0x80] sm:$0xff]
      %v101 = vld [vmem:[#allocation3 + $0x88] sm:$0xff]
      %v102 = vld [vmem:[#allocation3 + $0x90] sm:$0xff]
      %v103 = vld [vmem:[#allocation3 + $0x98] sm:$0xff]
      %v104 = vld [vmem:[#allocation3 + $0xa0] sm:$0xff]
      %v105 = vld [vmem:[#allocation3 + $0xa8] sm:$0xff]
      %v106 = vld [vmem:[#allocation3 + $0xb0] sm:$0xff]
      %v107 = vld [vmem:[#allocation3 + $0xb8] sm:$0xff]
      %v108 = vld [vmem:[#allocation3 + $0xc0] sm:$0xff]
      %v109 = vld [vmem:[#allocation3 + $0xc8] sm:$0xff]
      %v110 = vld [vmem:[#allocation3 + $0xd0] sm:$0xff]
      %v111 = vld [vmem:[#allocation3 + $0xd8] sm:$0xff]
      %v112 = vld [vmem:[#allocation3 + $0xe0] sm:$0xff]
      %v113 = vld [vmem:[#allocation3 + $0xe8] sm:$0xff]
      %v114 = vld [vmem:[#allocation3 + $0xf0] sm:$0xff]
      %v115 = vld [vmem:[#allocation3 + $0xf8] sm:$0xff]
      %v116 = vld [vmem:[#allocation6] sm:$0x1]
      %v117 = vld [vmem:[#allocation8] sm:$0x1]
      %118 = vadd.xlane.f32.xlu0 %v84
      %v119 = vpop.xlane.xlu0 %118
      %120 = vadd.xlane.f32.xlu0 %v85
      %v121 = vpop.xlane.xlu0 %120
      %122 = vadd.xlane.f32.xlu0 %v86
      %v123 = vpop.xlane.xlu0 %122
      %124 = vadd.xlane.f32.xlu0 %v87
      %v125 = vpop.xlane.xlu0 %124
      %126 = vadd.xlane.f32.xlu0 %v88
      %v127 = vpop.xlane.xlu0 %126
      %128 = vadd.xlane.f32.xlu0 %v89
      %v129 = vpop.xlane.xlu0 %128
      %130 = vadd.xlane.f32.xlu0 %v90
      %v131 = vpop.xlane.xlu0 %130
      %132 = vadd.xlane.f32.xlu0 %v91
      %v133 = vpop.xlane.xlu0 %132
      %134 = vadd.xlane.f32.xlu0 %v92
      %v135 = vpop.xlane.xlu0 %134
      %136 = vadd.xlane.f32.xlu0 %v93
      %v137 = vpop.xlane.xlu0 %136
      %138 = vadd.xlane.f32.xlu0 %v94
      %v139 = vpop.xlane.xlu0 %138
      %140 = vadd.xlane.f32.xlu0 %v95
      %v141 = vpop.xlane.xlu0 %140
      %142 = vadd.xlane.f32.xlu0 %v96
      %v143 = vpop.xlane.xlu0 %142
      %144 = vadd.xlane.f32.xlu0 %v97
      %v145 = vpop.xlane.xlu0 %144
      %146 = vadd.xlane.f32.xlu0 %v98
      %v147 = vpop.xlane.xlu0 %146
      %148 = vadd.xlane.f32.xlu0 %v99
      %v149 = vpop.xlane.xlu0 %148
      %150 = vadd.xlane.f32.xlu0 %v100
      %v151 = vpop.xlane.xlu0 %150
      %152 = vadd.xlane.f32.xlu0 %v101
      %v153 = vpop.xlane.xlu0 %152
      %154 = vadd.xlane.f32.xlu0 %v102
      %v155 = vpop.xlane.xlu0 %154
      %156 = vadd.xlane.f32.xlu0 %v103
      %v157 = vpop.xlane.xlu0 %156
      %158 = vadd.xlane.f32.xlu0 %v104
      %v159 = vpop.xlane.xlu0 %158
      %160 = vadd.xlane.f32.xlu0 %v105
      %v161 = vpop.xlane.xlu0 %160
      %162 = vadd.xlane.f32.xlu0 %v106
      %v163 = vpop.xlane.xlu0 %162
      %164 = vadd.xlane.f32.xlu0 %v107
      %v165 = vpop.xlane.xlu0 %164
      %166 = vadd.xlane.f32.xlu0 %v108
      %v167 = vpop.xlane.xlu0 %166
      %168 = vadd.xlane.f32.xlu0 %v109
      %v169 = vpop.xlane.xlu0 %168
      %170 = vadd.xlane.f32.xlu0 %v110
      %v171 = vpop.xlane.xlu0 %170
      %172 = vadd.xlane.f32.xlu0 %v111
      %v173 = vpop.xlane.xlu0 %172
      %174 = vadd.xlane.f32.xlu0 %v112
      %v175 = vpop.xlane.xlu0 %174
      %176 = vadd.xlane.f32.xlu0 %v113
      %v177 = vpop.xlane.xlu0 %176
      %178 = vadd.xlane.f32.xlu0 %v114
      %v179 = vpop.xlane.xlu0 %178
      %180 = vadd.xlane.f32.xlu0 %v115
      %v181 = vpop.xlane.xlu0 %180
      %v182 = vrcp.pop 128.0
      %v183 = vmul.f32 128.0, %v182
      %v184 = vsub.f32 1.0, %v183
      %v185 = vmul.f32 %v182, %v184
      %v186 = vadd.f32 %v182, %v185
      %vm187 = vweird.f32 %v182
      %v188 = vsel %vm187, %v182, %v186
      %v189 = vmul.f32 %v119, %v188
      %v190 = vmul.f32 %v121, %v188
      %v191 = vmul.f32 %v123, %v188
      %v192 = vmul.f32 %v125, %v188
      %v193 = vmul.f32 %v127, %v188
      %v194 = vmul.f32 %v129, %v188
      %v195 = vmul.f32 %v131, %v188
      %v196 = vmul.f32 %v133, %v188
      %v197 = vmul.f32 %v135, %v188
      %v198 = vmul.f32 %v137, %v188
      %v199 = vmul.f32 %v139, %v188
      %v200 = vmul.f32 %v141, %v188
      %v201 = vmul.f32 %v143, %v188
      %v202 = vmul.f32 %v145, %v188
      %v203 = vmul.f32 %v147, %v188
      %v204 = vmul.f32 %v149, %v188
      %v205 = vmul.f32 %v151, %v188
      %v206 = vmul.f32 %v153, %v188
      %v207 = vmul.f32 %v155, %v188
      %v208 = vmul.f32 %v157, %v188
      %v209 = vmul.f32 %v159, %v188
      %v210 = vmul.f32 %v161, %v188
      %v211 = vmul.f32 %v163, %v188
      %v212 = vmul.f32 %v165, %v188
      %v213 = vmul.f32 %v167, %v188
      %v214 = vmul.f32 %v169, %v188
      %v215 = vmul.f32 %v171, %v188
      %v216 = vmul.f32 %v173, %v188
      %v217 = vmul.f32 %v175, %v188
      %v218 = vmul.f32 %v177, %v188
      %v219 = vmul.f32 %v179, %v188
      %v220 = vmul.f32 %v181, %v188
      %v221 = vsub.f32 %v84, %v189
      %v222 = vsub.f32 %v85, %v190
      %v223 = vsub.f32 %v86, %v191
      %v224 = vsub.f32 %v87, %v192
      %v225 = vsub.f32 %v88, %v193
      %v226 = vsub.f32 %v89, %v194
      %v227 = vsub.f32 %v90, %v195
      %v228 = vsub.f32 %v91, %v196
      %v229 = vsub.f32 %v92, %v197
      %v230 = vsub.f32 %v93, %v198
      %v231 = vsub.f32 %v94, %v199
      %v232 = vsub.f32 %v95, %v200
      %v233 = vsub.f32 %v96, %v201
      %v234 = vsub.f32 %v97, %v202
      %v235 = vsub.f32 %v98, %v203
      %v236 = vsub.f32 %v99, %v204
      %v237 = vsub.f32 %v100, %v205
      %v238 = vsub.f32 %v101, %v206
      %v239 = vsub.f32 %v102, %v207
      %v240 = vsub.f32 %v103, %v208
      %v241 = vsub.f32 %v104, %v209
      %v242 = vsub.f32 %v105, %v210
      %v243 = vsub.f32 %v106, %v211
      %v244 = vsub.f32 %v107, %v212
      %v245 = vsub.f32 %v108, %v213
      %v246 = vsub.f32 %v109, %v214
      %v247 = vsub.f32 %v110, %v215
      %v248 = vsub.f32 %v111, %v216
      %v249 = vsub.f32 %v112, %v217
      %v250 = vsub.f32 %v113, %v218
      %v251 = vsub.f32 %v114, %v219
      %v252 = vsub.f32 %v115, %v220
      %v253 = vmul.f32 %v221, %v221
      %v254 = vmul.f32 %v222, %v222
      %v255 = vmul.f32 %v223, %v223
      %v256 = vmul.f32 %v224, %v224
      %v257 = vmul.f32 %v225, %v225
      %v258 = vmul.f32 %v226, %v226
      %v259 = vmul.f32 %v227, %v227
      %v260 = vmul.f32 %v228, %v228
      %v261 = vmul.f32 %v229, %v229
      %v262 = vmul.f32 %v230, %v230
      %v263 = vmul.f32 %v231, %v231
      %v264 = vmul.f32 %v232, %v232
      %v265 = vmul.f32 %v233, %v233
      %v266 = vmul.f32 %v234, %v234
      %v267 = vmul.f32 %v235, %v235
      %v268 = vmul.f32 %v236, %v236
      %v269 = vmul.f32 %v237, %v237
      %v270 = vmul.f32 %v238, %v238
      %v271 = vmul.f32 %v239, %v239
      %v272 = vmul.f32 %v240, %v240
      %v273 = vmul.f32 %v241, %v241
      %v274 = vmul.f32 %v242, %v242
      %v275 = vmul.f32 %v243, %v243
      %v276 = vmul.f32 %v244, %v244
      %v277 = vmul.f32 %v245, %v245
      %v278 = vmul.f32 %v246, %v246
      %v279 = vmul.f32 %v247, %v247
      %v280 = vmul.f32 %v248, %v248
      %v281 = vmul.f32 %v249, %v249
      %v282 = vmul.f32 %v250, %v250
      %v283 = vmul.f32 %v251, %v251
      %v284 = vmul.f32 %v252, %v252
      %285 = vadd.xlane.f32.xlu0 %v253
      %v286 = vpop.xlane.xlu0 %285
      %287 = vadd.xlane.f32.xlu0 %v254
      %v288 = vpop.xlane.xlu0 %287
      %289 = vadd.xlane.f32.xlu0 %v255
      %v290 = vpop.xlane.xlu0 %289
      %291 = vadd.xlane.f32.xlu0 %v256
      %v292 = vpop.xlane.xlu0 %291
      %293 = vadd.xlane.f32.xlu0 %v257
      %v294 = vpop.xlane.xlu0 %293
      %295 = vadd.xlane.f32.xlu0 %v258
      %v296 = vpop.xlane.xlu0 %295
      %297 = vadd.xlane.f32.xlu0 %v259
      %v298 = vpop.xlane.xlu0 %297
      %299 = vadd.xlane.f32.xlu0 %v260
      %v300 = vpop.xlane.xlu0 %299
      %301 = vadd.xlane.f32.xlu0 %v261
      %v302 = vpop.xlane.xlu0 %301
      %303 = vadd.xlane.f32.xlu0 %v262
      %v304 = vpop.xlane.xlu0 %303
      %305 = vadd.xlane.f32.xlu0 %v263
      %v306 = vpop.xlane.xlu0 %305
      %307 = vadd.xlane.f32.xlu0 %v264
      %v308 = vpop.xlane.xlu0 %307
      %309 = vadd.xlane.f32.xlu0 %v265
      %v310 = vpop.xlane.xlu0 %309
      %311 = vadd.xlane.f32.xlu0 %v266
      %v312 = vpop.xlane.xlu0 %311
      %313 = vadd.xlane.f32.xlu0 %v267
      %v314 = vpop.xlane.xlu0 %313
      %315 = vadd.xlane.f32.xlu0 %v268
      %v316 = vpop.xlane.xlu0 %315
      %317 = vadd.xlane.f32.xlu0 %v269
      %v318 = vpop.xlane.xlu0 %317
      %319 = vadd.xlane.f32.xlu0 %v270
      %v320 = vpop.xlane.xlu0 %319
      %321 = vadd.xlane.f32.xlu0 %v271
      %v322 = vpop.xlane.xlu0 %321
      %323 = vadd.xlane.f32.xlu0 %v272
      %v324 = vpop.xlane.xlu0 %323
      %325 = vadd.xlane.f32.xlu0 %v273
      %v326 = vpop.xlane.xlu0 %325
      %327 = vadd.xlane.f32.xlu0 %v274
      %v328 = vpop.xlane.xlu0 %327
      %329 = vadd.xlane.f32.xlu0 %v275
      %v330 = vpop.xlane.xlu0 %329
      %331 = vadd.xlane.f32.xlu0 %v276
      %v332 = vpop.xlane.xlu0 %331
      %333 = vadd.xlane.f32.xlu0 %v277
      %v334 = vpop.xlane.xlu0 %333
      %335 = vadd.xlane.f32.xlu0 %v278
      %v336 = vpop.xlane.xlu0 %335
      %337 = vadd.xlane.f32.xlu0 %v279
      %v338 = vpop.xlane.xlu0 %337
      %339 = vadd.xlane.f32.xlu0 %v280
      %v340 = vpop.xlane.xlu0 %339
      %341 = vadd.xlane.f32.xlu0 %v281
      %v342 = vpop.xlane.xlu0 %341
      %343 = vadd.xlane.f32.xlu0 %v282
      %v344 = vpop.xlane.xlu0 %343
      %345 = vadd.xlane.f32.xlu0 %v283
      %v346 = vpop.xlane.xlu0 %345
      %347 = vadd.xlane.f32.xlu0 %v284
      %v348 = vpop.xlane.xlu0 %347
      %v349 = vmul.f32 %v286, %v188
      %v350 = vmul.f32 %v288, %v188
      %v351 = vmul.f32 %v290, %v188
      %v352 = vmul.f32 %v292, %v188
      %v353 = vmul.f32 %v294, %v188
      %v354 = vmul.f32 %v296, %v188
      %v355 = vmul.f32 %v298, %v188
      %v356 = vmul.f32 %v300, %v188
      %v357 = vmul.f32 %v302, %v188
      %v358 = vmul.f32 %v304, %v188
      %v359 = vmul.f32 %v306, %v188
      %v360 = vmul.f32 %v308, %v188
      %v361 = vmul.f32 %v310, %v188
      %v362 = vmul.f32 %v312, %v188
      %v363 = vmul.f32 %v314, %v188
      %v364 = vmul.f32 %v316, %v188
      %v365 = vmul.f32 %v318, %v188
      %v366 = vmul.f32 %v320, %v188
      %v367 = vmul.f32 %v322, %v188
      %v368 = vmul.f32 %v324, %v188
      %v369 = vmul.f32 %v326, %v188
      %v370 = vmul.f32 %v328, %v188
      %v371 = vmul.f32 %v330, %v188
      %v372 = vmul.f32 %v332, %v188
      %v373 = vmul.f32 %v334, %v188
      %v374 = vmul.f32 %v336, %v188
      %v375 = vmul.f32 %v338, %v188
      %v376 = vmul.f32 %v340, %v188
      %v377 = vmul.f32 %v342, %v188
      %v378 = vmul.f32 %v344, %v188
      %v379 = vmul.f32 %v346, %v188
      %v380 = vmul.f32 %v348, %v188
      %v381 = vadd.f32 %v349, 1e-05
      %v382 = vadd.f32 %v350, 1e-05
      %v383 = vadd.f32 %v351, 1e-05
      %v384 = vadd.f32 %v352, 1e-05
      %v385 = vadd.f32 %v353, 1e-05
      %v386 = vadd.f32 %v354, 1e-05
      %v387 = vadd.f32 %v355, 1e-05
      %v388 = vadd.f32 %v356, 1e-05
      %v389 = vadd.f32 %v357, 1e-05
      %v390 = vadd.f32 %v358, 1e-05
      %v391 = vadd.f32 %v359, 1e-05
      %v392 = vadd.f32 %v360, 1e-05
      %v393 = vadd.f32 %v361, 1e-05
      %v394 = vadd.f32 %v362, 1e-05
      %v395 = vadd.f32 %v363, 1e-05
      %v396 = vadd.f32 %v364, 1e-05
      %v397 = vadd.f32 %v365, 1e-05
      %v398 = vadd.f32 %v366, 1e-05
      %v399 = vadd.f32 %v367, 1e-05
      %v400 = vadd.f32 %v368, 1e-05
      %v401 = vadd.f32 %v369, 1e-05
      %v402 = vadd.f32 %v370, 1e-05
      %v403 = vadd.f32 %v371, 1e-05
      %v404 = vadd.f32 %v372, 1e-05
      %v405 = vadd.f32 %v373, 1e-05
      %v406 = vadd.f32 %v374, 1e-05
      %v407 = vadd.f32 %v375, 1e-05
      %v408 = vadd.f32 %v376, 1e-05
      %v409 = vadd.f32 %v377, 1e-05
      %v410 = vadd.f32 %v378, 1e-05
      %v411 = vadd.f32 %v379, 1e-05
      %v412 = vadd.f32 %v380, 1e-05
      %v413 = vrsqrt.pop %v381
      %v414 = vmul.f32 %v413, %v381
      %v415 = vmul.f32 %v414, %v413
      %v416 = vmul.f32 0.5, %v415
      %v417 = vsub.f32 1.5, %v416
      %v418 = vmul.f32 %v413, %v417
      %vm419 = vweird.f32 %v381
      %vm420 = vweird.f32 %v413
      %vm421 = vmor %vm419, %vm420
      %v422 = vsel %vm421, %v413, %v418
      %v423 = vrsqrt.pop %v382
      %v424 = vmul.f32 %v423, %v382
      %v425 = vmul.f32 %v424, %v423
      %v426 = vmul.f32 0.5, %v425
      %v427 = vsub.f32 1.5, %v426
      %v428 = vmul.f32 %v423, %v427
      %vm429 = vweird.f32 %v382
      %vm430 = vweird.f32 %v423
      %vm431 = vmor %vm429, %vm430
      %v432 = vsel %vm431, %v423, %v428
      %v433 = vrsqrt.pop %v383
      %v434 = vmul.f32 %v433, %v383
      %v435 = vmul.f32 %v434, %v433
      %v436 = vmul.f32 0.5, %v435
      %v437 = vsub.f32 1.5, %v436
      %v438 = vmul.f32 %v433, %v437
      %vm439 = vweird.f32 %v383
      %vm440 = vweird.f32 %v433
      %vm441 = vmor %vm439, %vm440
      %v442 = vsel %vm441, %v433, %v438
      %v443 = vrsqrt.pop %v384
      %v444 = vmul.f32 %v443, %v384
      %v445 = vmul.f32 %v444, %v443
      %v446 = vmul.f32 0.5, %v445
      %v447 = vsub.f32 1.5, %v446
      %v448 = vmul.f32 %v443, %v447
      %vm449 = vweird.f32 %v384
      %vm450 = vweird.f32 %v443
      %vm451 = vmor %vm449, %vm450
      %v452 = vsel %vm451, %v443, %v448
      %v453 = vrsqrt.pop %v385
      %v454 = vmul.f32 %v453, %v385
      %v455 = vmul.f32 %v454, %v453
      %v456 = vmul.f32 0.5, %v455
      %v457 = vsub.f32 1.5, %v456
      %v458 = vmul.f32 %v453, %v457
      %vm459 = vweird.f32 %v385
      %vm460 = vweird.f32 %v453
      %vm461 = vmor %vm459, %vm460
      %v462 = vsel %vm461, %v453, %v458
      %v463 = vrsqrt.pop %v386
      %v464 = vmul.f32 %v463, %v386
      %v465 = vmul.f32 %v464, %v463
      %v466 = vmul.f32 0.5, %v465
      %v467 = vsub.f32 1.5, %v466
      %v468 = vmul.f32 %v463, %v467
      %vm469 = vweird.f32 %v386
      %vm470 = vweird.f32 %v463
      %vm471 = vmor %vm469, %vm470
      %v472 = vsel %vm471, %v463, %v468
      %v473 = vrsqrt.pop %v387
      %v474 = vmul.f32 %v473, %v387
      %v475 = vmul.f32 %v474, %v473
      %v476 = vmul.f32 0.5, %v475
      %v477 = vsub.f32 1.5, %v476
      %v478 = vmul.f32 %v473, %v477
      %vm479 = vweird.f32 %v387
      %vm480 = vweird.f32 %v473
      %vm481 = vmor %vm479, %vm480
      %v482 = vsel %vm481, %v473, %v478
      %v483 = vrsqrt.pop %v388
      %v484 = vmul.f32 %v483, %v388
      %v485 = vmul.f32 %v484, %v483
      %v486 = vmul.f32 0.5, %v485
      %v487 = vsub.f32 1.5, %v486
      %v488 = vmul.f32 %v483, %v487
      %vm489 = vweird.f32 %v388
      %vm490 = vweird.f32 %v483
      %vm491 = vmor %vm489, %vm490
      %v492 = vsel %vm491, %v483, %v488
      %v493 = vrsqrt.pop %v389
      %v494 = vmul.f32 %v493, %v389
      %v495 = vmul.f32 %v494, %v493
      %v496 = vmul.f32 0.5, %v495
      %v497 = vsub.f32 1.5, %v496
      %v498 = vmul.f32 %v493, %v497
      %vm499 = vweird.f32 %v389
      %vm500 = vweird.f32 %v493
      %vm501 = vmor %vm499, %vm500
      %v502 = vsel %vm501, %v493, %v498
      %v503 = vrsqrt.pop %v390
      %v504 = vmul.f32 %v503, %v390
      %v505 = vmul.f32 %v504, %v503
      %v506 = vmul.f32 0.5, %v505
      %v507 = vsub.f32 1.5, %v506
      %v508 = vmul.f32 %v503, %v507
      %vm509 = vweird.f32 %v390
      %vm510 = vweird.f32 %v503
      %vm511 = vmor %vm509, %vm510
      %v512 = vsel %vm511, %v503, %v508
      %v513 = vrsqrt.pop %v391
      %v514 = vmul.f32 %v513, %v391
      %v515 = vmul.f32 %v514, %v513
      %v516 = vmul.f32 0.5, %v515
      %v517 = vsub.f32 1.5, %v516
      %v518 = vmul.f32 %v513, %v517
      %vm519 = vweird.f32 %v391
      %vm520 = vweird.f32 %v513
      %vm521 = vmor %vm519, %vm520
      %v522 = vsel %vm521, %v513, %v518
      %v523 = vrsqrt.pop %v392
      %v524 = vmul.f32 %v523, %v392
      %v525 = vmul.f32 %v524, %v523
      %v526 = vmul.f32 0.5, %v525
      %v527 = vsub.f32 1.5, %v526
      %v528 = vmul.f32 %v523, %v527
      %vm529 = vweird.f32 %v392
      %vm530 = vweird.f32 %v523
      %vm531 = vmor %vm529, %vm530
      %v532 = vsel %vm531, %v523, %v528
      %v533 = vrsqrt.pop %v393
      %v534 = vmul.f32 %v533, %v393
      %v535 = vmul.f32 %v534, %v533
      %v536 = vmul.f32 0.5, %v535
      %v537 = vsub.f32 1.5, %v536
      %v538 = vmul.f32 %v533, %v537
      %vm539 = vweird.f32 %v393
      %vm540 = vweird.f32 %v533
      %vm541 = vmor %vm539, %vm540
      %v542 = vsel %vm541, %v533, %v538
      %v543 = vrsqrt.pop %v394
      %v544 = vmul.f32 %v543, %v394
      %v545 = vmul.f32 %v544, %v543
      %v546 = vmul.f32 0.5, %v545
      %v547 = vsub.f32 1.5, %v546
      %v548 = vmul.f32 %v543, %v547
      %vm549 = vweird.f32 %v394
      %vm550 = vweird.f32 %v543
      %vm551 = vmor %vm549, %vm550
      %v552 = vsel %vm551, %v543, %v548
      %v553 = vrsqrt.pop %v395
      %v554 = vmul.f32 %v553, %v395
      %v555 = vmul.f32 %v554, %v553
      %v556 = vmul.f32 0.5, %v555
      %v557 = vsub.f32 1.5, %v556
      %v558 = vmul.f32 %v553, %v557
      %vm559 = vweird.f32 %v395
      %vm560 = vweird.f32 %v553
      %vm561 = vmor %vm559, %vm560
      %v562 = vsel %vm561, %v553, %v558
      %v563 = vrsqrt.pop %v396
      %v564 = vmul.f32 %v563, %v396
      %v565 = vmul.f32 %v564, %v563
      %v566 = vmul.f32 0.5, %v565
      %v567 = vsub.f32 1.5, %v566
      %v568 = vmul.f32 %v563, %v567
      %vm569 = vweird.f32 %v396
      %vm570 = vweird.f32 %v563
      %vm571 = vmor %vm569, %vm570
      %v572 = vsel %vm571, %v563, %v568
      %v573 = vrsqrt.pop %v397
      %v574 = vmul.f32 %v573, %v397
      %v575 = vmul.f32 %v574, %v573
      %v576 = vmul.f32 0.5, %v575
      %v577 = vsub.f32 1.5, %v576
      %v578 = vmul.f32 %v573, %v577
      %vm579 = vweird.f32 %v397
      %vm580 = vweird.f32 %v573
      %vm581 = vmor %vm579, %vm580
      %v582 = vsel %vm581, %v573, %v578
      %v583 = vrsqrt.pop %v398
      %v584 = vmul.f32 %v583, %v398
      %v585 = vmul.f32 %v584, %v583
      %v586 = vmul.f32 0.5, %v585
      %v587 = vsub.f32 1.5, %v586
      %v588 = vmul.f32 %v583, %v587
      %vm589 = vweird.f32 %v398
      %vm590 = vweird.f32 %v583
      %vm591 = vmor %vm589, %vm590
      %v592 = vsel %vm591, %v583, %v588
      %v593 = vrsqrt.pop %v399
      %v594 = vmul.f32 %v593, %v399
      %v595 = vmul.f32 %v594, %v593
      %v596 = vmul.f32 0.5, %v595
      %v597 = vsub.f32 1.5, %v596
      %v598 = vmul.f32 %v593, %v597
      %vm599 = vweird.f32 %v399
      %vm600 = vweird.f32 %v593
      %vm601 = vmor %vm599, %vm600
      %v602 = vsel %vm601, %v593, %v598
      %v603 = vrsqrt.pop %v400
      %v604 = vmul.f32 %v603, %v400
      %v605 = vmul.f32 %v604, %v603
      %v606 = vmul.f32 0.5, %v605
      %v607 = vsub.f32 1.5, %v606
      %v608 = vmul.f32 %v603, %v607
      %vm609 = vweird.f32 %v400
      %vm610 = vweird.f32 %v603
      %vm611 = vmor %vm609, %vm610
      %v612 = vsel %vm611, %v603, %v608
      %v613 = vrsqrt.pop %v401
      %v614 = vmul.f32 %v613, %v401
      %v615 = vmul.f32 %v614, %v613
      %v616 = vmul.f32 0.5, %v615
      %v617 = vsub.f32 1.5, %v616
      %v618 = vmul.f32 %v613, %v617
      %vm619 = vweird.f32 %v401
      %vm620 = vweird.f32 %v613
      %vm621 = vmor %vm619, %vm620
      %v622 = vsel %vm621, %v613, %v618
      %v623 = vrsqrt.pop %v402
      %v624 = vmul.f32 %v623, %v402
      %v625 = vmul.f32 %v624, %v623
      %v626 = vmul.f32 0.5, %v625
      %v627 = vsub.f32 1.5, %v626
      %v628 = vmul.f32 %v623, %v627
      %vm629 = vweird.f32 %v402
      %vm630 = vweird.f32 %v623
      %vm631 = vmor %vm629, %vm630
      %v632 = vsel %vm631, %v623, %v628
      %v633 = vrsqrt.pop %v403
      %v634 = vmul.f32 %v633, %v403
      %v635 = vmul.f32 %v634, %v633
      %v636 = vmul.f32 0.5, %v635
      %v637 = vsub.f32 1.5, %v636
      %v638 = vmul.f32 %v633, %v637
      %vm639 = vweird.f32 %v403
      %vm640 = vweird.f32 %v633
      %vm641 = vmor %vm639, %vm640
      %v642 = vsel %vm641, %v633, %v638
      %v643 = vrsqrt.pop %v404
      %v644 = vmul.f32 %v643, %v404
      %v645 = vmul.f32 %v644, %v643
      %v646 = vmul.f32 0.5, %v645
      %v647 = vsub.f32 1.5, %v646
      %v648 = vmul.f32 %v643, %v647
      %vm649 = vweird.f32 %v404
      %vm650 = vweird.f32 %v643
      %vm651 = vmor %vm649, %vm650
      %v652 = vsel %vm651, %v643, %v648
      %v653 = vrsqrt.pop %v405
      %v654 = vmul.f32 %v653, %v405
      %v655 = vmul.f32 %v654, %v653
      %v656 = vmul.f32 0.5, %v655
      %v657 = vsub.f32 1.5, %v656
      %v658 = vmul.f32 %v653, %v657
      %vm659 = vweird.f32 %v405
      %vm660 = vweird.f32 %v653
      %vm661 = vmor %vm659, %vm660
      %v662 = vsel %vm661, %v653, %v658
      %v663 = vrsqrt.pop %v406
      %v664 = vmul.f32 %v663, %v406
      %v665 = vmul.f32 %v664, %v663
      %v666 = vmul.f32 0.5, %v665
      %v667 = vsub.f32 1.5, %v666
      %v668 = vmul.f32 %v663, %v667
      %vm669 = vweird.f32 %v406
      %vm670 = vweird.f32 %v663
      %vm671 = vmor %vm669, %vm670
      %v672 = vsel %vm671, %v663, %v668
      %v673 = vrsqrt.pop %v407
      %v674 = vmul.f32 %v673, %v407
      %v675 = vmul.f32 %v674, %v673
      %v676 = vmul.f32 0.5, %v675
      %v677 = vsub.f32 1.5, %v676
      %v678 = vmul.f32 %v673, %v677
      %vm679 = vweird.f32 %v407
      %vm680 = vweird.f32 %v673
      %vm681 = vmor %vm679, %vm680
      %v682 = vsel %vm681, %v673, %v678
      %v683 = vrsqrt.pop %v408
      %v684 = vmul.f32 %v683, %v408
      %v685 = vmul.f32 %v684, %v683
      %v686 = vmul.f32 0.5, %v685
      %v687 = vsub.f32 1.5, %v686
      %v688 = vmul.f32 %v683, %v687
      %vm689 = vweird.f32 %v408
      %vm690 = vweird.f32 %v683
      %vm691 = vmor %vm689, %vm690
      %v692 = vsel %vm691, %v683, %v688
      %v693 = vrsqrt.pop %v409
      %v694 = vmul.f32 %v693, %v409
      %v695 = vmul.f32 %v694, %v693
      %v696 = vmul.f32 0.5, %v695
      %v697 = vsub.f32 1.5, %v696
      %v698 = vmul.f32 %v693, %v697
      %vm699 = vweird.f32 %v409
      %vm700 = vweird.f32 %v693
      %vm701 = vmor %vm699, %vm700
      %v702 = vsel %vm701, %v693, %v698
      %v703 = vrsqrt.pop %v410
      %v704 = vmul.f32 %v703, %v410
      %v705 = vmul.f32 %v704, %v703
      %v706 = vmul.f32 0.5, %v705
      %v707 = vsub.f32 1.5, %v706
      %v708 = vmul.f32 %v703, %v707
      %vm709 = vweird.f32 %v410
      %vm710 = vweird.f32 %v703
      %vm711 = vmor %vm709, %vm710
      %v712 = vsel %vm711, %v703, %v708
      %v713 = vrsqrt.pop %v411
      %v714 = vmul.f32 %v713, %v411
      %v715 = vmul.f32 %v714, %v713
      %v716 = vmul.f32 0.5, %v715
      %v717 = vsub.f32 1.5, %v716
      %v718 = vmul.f32 %v713, %v717
      %vm719 = vweird.f32 %v411
      %vm720 = vweird.f32 %v713
      %vm721 = vmor %vm719, %vm720
      %v722 = vsel %vm721, %v713, %v718
      %v723 = vrsqrt.pop %v412
      %v724 = vmul.f32 %v723, %v412
      %v725 = vmul.f32 %v724, %v723
      %v726 = vmul.f32 0.5, %v725
      %v727 = vsub.f32 1.5, %v726
      %v728 = vmul.f32 %v723, %v727
      %vm729 = vweird.f32 %v412
      %vm730 = vweird.f32 %v723
      %vm731 = vmor %vm729, %vm730
      %v732 = vsel %vm731, %v723, %v728
      %v733 = vmul.f32 %v221, %v422
      %v734 = vmul.f32 %v222, %v432
      %v735 = vmul.f32 %v223, %v442
      %v736 = vmul.f32 %v224, %v452
      %v737 = vmul.f32 %v225, %v462
      %v738 = vmul.f32 %v226, %v472
      %v739 = vmul.f32 %v227, %v482
      %v740 = vmul.f32 %v228, %v492
      %v741 = vmul.f32 %v229, %v502
      %v742 = vmul.f32 %v230, %v512
      %v743 = vmul.f32 %v231, %v522
      %v744 = vmul.f32 %v232, %v532
      %v745 = vmul.f32 %v233, %v542
      %v746 = vmul.f32 %v234, %v552
      %v747 = vmul.f32 %v235, %v562
      %v748 = vmul.f32 %v236, %v572
      %v749 = vmul.f32 %v237, %v582
      %v750 = vmul.f32 %v238, %v592
      %v751 = vmul.f32 %v239, %v602
      %v752 = vmul.f32 %v240, %v612
      %v753 = vmul.f32 %v241, %v622
      %v754 = vmul.f32 %v242, %v632
      %v755 = vmul.f32 %v243, %v642
      %v756 = vmul.f32 %v244, %v652
      %v757 = vmul.f32 %v245, %v662
      %v758 = vmul.f32 %v246, %v672
      %v759 = vmul.f32 %v247, %v682
      %v760 = vmul.f32 %v248, %v692
      %v761 = vmul.f32 %v249, %v702
      %v762 = vmul.f32 %v250, %v712
      %v763 = vmul.f32 %v251, %v722
      %v764 = vmul.f32 %v252, %v732
      %v766 = vperm.slane %v116, 0
      %v768 = vmul.f32 %v733, %v766
      %v769 = vmul.f32 %v734, %v766
      %v770 = vmul.f32 %v735, %v766
      %v771 = vmul.f32 %v736, %v766
      %v772 = vmul.f32 %v737, %v766
      %v773 = vmul.f32 %v738, %v766
      %v774 = vmul.f32 %v739, %v766
      %v775 = vmul.f32 %v740, %v766
      %v776 = vmul.f32 %v741, %v766
      %v777 = vmul.f32 %v742, %v766
      %v778 = vmul.f32 %v743, %v766
      %v779 = vmul.f32 %v744, %v766
      %v780 = vmul.f32 %v745, %v766
      %v781 = vmul.f32 %v746, %v766
      %v782 = vmul.f32 %v747, %v766
      %v783 = vmul.f32 %v748, %v766
      %v784 = vmul.f32 %v749, %v766
      %v785 = vmul.f32 %v750, %v766
      %v786 = vmul.f32 %v751, %v766
      %v787 = vmul.f32 %v752, %v766
      %v788 = vmul.f32 %v753, %v766
      %v789 = vmul.f32 %v754, %v766
      %v790 = vmul.f32 %v755, %v766
      %v791 = vmul.f32 %v756, %v766
      %v792 = vmul.f32 %v757, %v766
      %v793 = vmul.f32 %v758, %v766
      %v794 = vmul.f32 %v759, %v766
      %v795 = vmul.f32 %v760, %v766
      %v796 = vmul.f32 %v761, %v766
      %v797 = vmul.f32 %v762, %v766
      %v798 = vmul.f32 %v763, %v766
      %v799 = vmul.f32 %v764, %v766
      %v801 = vperm.slane %v117, 0
      %v803 = vadd.f32 %v768, %v801
      %v804 = vadd.f32 %v769, %v801
      %v805 = vadd.f32 %v770, %v801
      %v806 = vadd.f32 %v771, %v801
      %v807 = vadd.f32 %v772, %v801
      %v808 = vadd.f32 %v773, %v801
      %v809 = vadd.f32 %v774, %v801
      %v810 = vadd.f32 %v775, %v801
      %v811 = vadd.f32 %v776, %v801
      %v812 = vadd.f32 %v777, %v801
      %v813 = vadd.f32 %v778, %v801
      %v814 = vadd.f32 %v779, %v801
      %v815 = vadd.f32 %v780, %v801
      %v816 = vadd.f32 %v781, %v801
      %v817 = vadd.f32 %v782, %v801
      %v818 = vadd.f32 %v783, %v801
      %v819 = vadd.f32 %v784, %v801
      %v820 = vadd.f32 %v785, %v801
      %v821 = vadd.f32 %v786, %v801
      %v822 = vadd.f32 %v787, %v801
      %v823 = vadd.f32 %v788, %v801
      %v824 = vadd.f32 %v789, %v801
      %v825 = vadd.f32 %v790, %v801
      %v826 = vadd.f32 %v791, %v801
      %v827 = vadd.f32 %v792, %v801
      %v828 = vadd.f32 %v793, %v801
      %v829 = vadd.f32 %v794, %v801
      %v830 = vadd.f32 %v795, %v801
      %v831 = vadd.f32 %v796, %v801
      %v832 = vadd.f32 %v797, %v801
      %v833 = vadd.f32 %v798, %v801
      %v834 = vadd.f32 %v799, %v801
      %v835 = vpack.c.bf16 %v803, %v803
      %v836 = vpack.c.bf16 %v804, %v804
      %v837 = vpack.c.bf16 %v805, %v805
      %v838 = vpack.c.bf16 %v806, %v806
      %v839 = vpack.c.bf16 %v807, %v807
      %v840 = vpack.c.bf16 %v808, %v808
      %v841 = vpack.c.bf16 %v809, %v809
      %v842 = vpack.c.bf16 %v810, %v810
      %v843 = vpack.c.bf16 %v811, %v811
      %v844 = vpack.c.bf16 %v812, %v812
      %v845 = vpack.c.bf16 %v813, %v813
      %v846 = vpack.c.bf16 %v814, %v814
      %v847 = vpack.c.bf16 %v815, %v815
      %v848 = vpack.c.bf16 %v816, %v816
      %v849 = vpack.c.bf16 %v817, %v817
      %v850 = vpack.c.bf16 %v818, %v818
      %v851 = vpack.c.bf16 %v819, %v819
      %v852 = vpack.c.bf16 %v820, %v820
      %v853 = vpack.c.bf16 %v821, %v821
      %v854 = vpack.c.bf16 %v822, %v822
      %v855 = vpack.c.bf16 %v823, %v823
      %v856 = vpack.c.bf16 %v824, %v824
      %v857 = vpack.c.bf16 %v825, %v825
      %v858 = vpack.c.bf16 %v826, %v826
      %v859 = vpack.c.bf16 %v827, %v827
      %v860 = vpack.c.bf16 %v828, %v828
      %v861 = vpack.c.bf16 %v829, %v829
      %v862 = vpack.c.bf16 %v830, %v830
      %v863 = vpack.c.bf16 %v831, %v831
      %v864 = vpack.c.bf16 %v832, %v832
      %v865 = vpack.c.bf16 %v833, %v833
      %v866 = vpack.c.bf16 %v834, %v834
      %867 = vst [vmem:[#allocation2] sm:$0xf] %v835
      %868 = vst [vmem:[#allocation2 + $0x4] sm:$0xf] %v836
      %869 = vst [vmem:[#allocation2 + $0x8] sm:$0xf] %v837
      %870 = vst [vmem:[#allocation2 + $0xc] sm:$0xf] %v838
      %871 = vst [vmem:[#allocation2 + $0x10] sm:$0xf] %v839
      %872 = vst [vmem:[#allocation2 + $0x14] sm:$0xf] %v840
      %873 = vst [vmem:[#allocation2 + $0x18] sm:$0xf] %v841
      %874 = vst [vmem:[#allocation2 + $0x1c] sm:$0xf] %v842
      %875 = vst [vmem:[#allocation2 + $0x20] sm:$0xf] %v843
      %876 = vst [vmem:[#allocation2 + $0x24] sm:$0xf] %v844
      %877 = vst [vmem:[#allocation2 + $0x28] sm:$0xf] %v845
      %878 = vst [vmem:[#allocation2 + $0x2c] sm:$0xf] %v846
      %879 = vst [vmem:[#allocation2 + $0x30] sm:$0xf] %v847
      %880 = vst [vmem:[#allocation2 + $0x34] sm:$0xf] %v848
      %881 = vst [vmem:[#allocation2 + $0x38] sm:$0xf] %v849
      %882 = vst [vmem:[#allocation2 + $0x3c] sm:$0xf] %v850
      %883 = vst [vmem:[#allocation2 + $0x40] sm:$0xf] %v851
      %884 = vst [vmem:[#allocation2 + $0x44] sm:$0xf] %v852
      %885 = vst [vmem:[#allocation2 + $0x48] sm:$0xf] %v853
      %886 = vst [vmem:[#allocation2 + $0x4c] sm:$0xf] %v854
      %887 = vst [vmem:[#allocation2 + $0x50] sm:$0xf] %v855
      %888 = vst [vmem:[#allocation2 + $0x54] sm:$0xf] %v856
      %889 = vst [vmem:[#allocation2 + $0x58] sm:$0xf] %v857
      %890 = vst [vmem:[#allocation2 + $0x5c] sm:$0xf] %v858
      %891 = vst [vmem:[#allocation2 + $0x60] sm:$0xf] %v859
      %892 = vst [vmem:[#allocation2 + $0x64] sm:$0xf] %v860
      %893 = vst [vmem:[#allocation2 + $0x68] sm:$0xf] %v861
      %894 = vst [vmem:[#allocation2 + $0x6c] sm:$0xf] %v862
      %895 = vst [vmem:[#allocation2 + $0x70] sm:$0xf] %v863
      %896 = vst [vmem:[#allocation2 + $0x74] sm:$0xf] %v864
      %897 = vst [vmem:[#allocation2 + $0x78] sm:$0xf] %v865
      %898 = vst [vmem:[#allocation2 + $0x7c] sm:$0xf] %v866
    $region41: #{tpu_custom_call.1} parent=1 // pred_fallthru
      _
    %v899 = vld [vmem:[#allocation2] sm:$0xf]
    %v900 = vld [vmem:[#allocation2 + $0x4] sm:$0xf]
    %v901 = vld [vmem:[#allocation2 + $0x8] sm:$0xf]
    %v902 = vld [vmem:[#allocation2 + $0xc] sm:$0xf]
    %v903 = vld [vmem:[#allocation2 + $0x10] sm:$0xf]
    %v904 = vld [vmem:[#allocation2 + $0x14] sm:$0xf]
    %v905 = vld [vmem:[#allocation2 + $0x18] sm:$0xf]
    %v906 = vld [vmem:[#allocation2 + $0x1c] sm:$0xf]
    %v907 = vld [vmem:[#allocation2 + $0x20] sm:$0xf]
    %v908 = vld [vmem:[#allocation2 + $0x24] sm:$0xf]
    %v909 = vld [vmem:[#allocation2 + $0x28] sm:$0xf]
    %v910 = vld [vmem:[#allocation2 + $0x2c] sm:$0xf]
    %v911 = vld [vmem:[#allocation2 + $0x30] sm:$0xf]
    %v912 = vld [vmem:[#allocation2 + $0x34] sm:$0xf]
    %v913 = vld [vmem:[#allocation2 + $0x38] sm:$0xf]
    %v914 = vld [vmem:[#allocation2 + $0x3c] sm:$0xf]
    %v915 = vld [vmem:[#allocation2 + $0x40] sm:$0xf]
    %v916 = vld [vmem:[#allocation2 + $0x44] sm:$0xf]
    %v917 = vld [vmem:[#allocation2 + $0x48] sm:$0xf]
    %v918 = vld [vmem:[#allocation2 + $0x4c] sm:$0xf]
    %v919 = vld [vmem:[#allocation2 + $0x50] sm:$0xf]
    %v920 = vld [vmem:[#allocation2 + $0x54] sm:$0xf]
    %v921 = vld [vmem:[#allocation2 + $0x58] sm:$0xf]
    %v922 = vld [vmem:[#allocation2 + $0x5c] sm:$0xf]
    %v923 = vld [vmem:[#allocation2 + $0x60] sm:$0xf]
    %v924 = vld [vmem:[#allocation2 + $0x64] sm:$0xf]
    %v925 = vld [vmem:[#allocation2 + $0x68] sm:$0xf]
    %v926 = vld [vmem:[#allocation2 + $0x6c] sm:$0xf]
    %v927 = vld [vmem:[#allocation2 + $0x70] sm:$0xf]
    %v928 = vld [vmem:[#allocation2 + $0x74] sm:$0xf]
    %v929 = vld [vmem:[#allocation2 + $0x78] sm:$0xf]
    %v930 = vld [vmem:[#allocation2 + $0x7c] sm:$0xf]
    %v931 = vld [vmem:[#allocation9] sm:$0xff]
    %v932 = vld [vmem:[#allocation9 + $0x8] sm:$0xf]
    %v933 = vld [vmem:[#allocation9 + $0xc] sm:$0xff]
    %v934 = vld [vmem:[#allocation9 + $0x14] sm:$0xf]
    %v935 = vld [vmem:[#allocation9 + $0x18] sm:$0xff]
    %v936 = vld [vmem:[#allocation9 + $0x20] sm:$0xf]
    %v937 = vld [vmem:[#allocation9 + $0x24] sm:$0xff]
    %v938 = vld [vmem:[#allocation9 + $0x2c] sm:$0xf]
    %v939 = vld [vmem:[#allocation9 + $0x30] sm:$0xff]
    %v940 = vld [vmem:[#allocation9 + $0x38] sm:$0xf]
    %v941 = vld [vmem:[#allocation9 + $0x3c] sm:$0xff]
    %v942 = vld [vmem:[#allocation9 + $0x44] sm:$0xf]
    %v943 = vld [vmem:[#allocation9 + $0x48] sm:$0xff]
    %v944 = vld [vmem:[#allocation9 + $0x50] sm:$0xf]
    %v945 = vld [vmem:[#allocation9 + $0x54] sm:$0xff]
    %v946 = vld [vmem:[#allocation9 + $0x5c] sm:$0xf]
    %v947 = vld [vmem:[#allocation9 + $0x60] sm:$0xff]
    %v948 = vld [vmem:[#allocation9 + $0x68] sm:$0xf]
    %v949 = vld [vmem:[#allocation9 + $0x6c] sm:$0xff]
    %v950 = vld [vmem:[#allocation9 + $0x74] sm:$0xf]
    %v951 = vld [vmem:[#allocation9 + $0x78] sm:$0xff]
    %v952 = vld [vmem:[#allocation9 + $0x80] sm:$0xf]
    %v953 = vld [vmem:[#allocation9 + $0x84] sm:$0xff]
    %v954 = vld [vmem:[#allocation9 + $0x8c] sm:$0xf]
    %v955 = vld [vmem:[#allocation9 + $0x90] sm:$0xff]
    %v956 = vld [vmem:[#allocation9 + $0x98] sm:$0xf]
    %v957 = vld [vmem:[#allocation9 + $0x9c] sm:$0xff]
    %v958 = vld [vmem:[#allocation9 + $0xa4] sm:$0xf]
    %v959 = vld [vmem:[#allocation9 + $0xa8] sm:$0xff]
    %v960 = vld [vmem:[#allocation9 + $0xb0] sm:$0xf]
    %v961 = vld [vmem:[#allocation9 + $0xb4] sm:$0xff]
    %v962 = vld [vmem:[#allocation9 + $0xbc] sm:$0xf]
    %v963 = vld [vmem:[%s4] sm:$0x7]
    %v965 = vperm.slane %v963, 0
    %v966 = vperm.slane %v963, 1
    %v967 = vperm.slane %v963, 2
    %v1003 = vunpack.c.l.b16 %v899
    %v1004 = vunpack.c.l.b16 %v900
    %v1005 = vunpack.c.l.b16 %v901
    %v1006 = vunpack.c.l.b16 %v902
    %v1007 = vunpack.c.l.b16 %v903
    %v1008 = vunpack.c.l.b16 %v904
    %v1009 = vunpack.c.l.b16 %v905
    %v1010 = vunpack.c.l.b16 %v906
    %v1011 = vunpack.c.l.b16 %v907
    %v1012 = vunpack.c.l.b16 %v908
    %v1013 = vunpack.c.l.b16 %v909
    %v1014 = vunpack.c.l.b16 %v910
    %v1015 = vunpack.c.l.b16 %v911
    %v1016 = vunpack.c.l.b16 %v912
    %v1017 = vunpack.c.l.b16 %v913
    %v1018 = vunpack.c.l.b16 %v914
    %v1019 = vunpack.c.l.b16 %v915
    %v1020 = vunpack.c.l.b16 %v916
    %v1021 = vunpack.c.l.b16 %v917
    %v1022 = vunpack.c.l.b16 %v918
    %v1023 = vunpack.c.l.b16 %v919
    %v1024 = vunpack.c.l.b16 %v920
    %v1025 = vunpack.c.l.b16 %v921
    %v1026 = vunpack.c.l.b16 %v922
    %v1027 = vunpack.c.l.b16 %v923
    %v1028 = vunpack.c.l.b16 %v924
    %v1029 = vunpack.c.l.b16 %v925
    %v1030 = vunpack.c.l.b16 %v926
    %v1031 = vunpack.c.l.b16 %v927
    %v1032 = vunpack.c.l.b16 %v928
    %v1033 = vunpack.c.l.b16 %v929
    %v1034 = vunpack.c.l.b16 %v930
    %v1035 = vpack.c.b16 %v1004, %v1003
    %v1036 = vpack.c.b16 %v1006, %v1005
    %v1037 = vpack.c.b16 %v1008, %v1007
    %v1038 = vpack.c.b16 %v1010, %v1009
    %v1039 = vpack.c.b16 %v1012, %v1011
    %v1040 = vpack.c.b16 %v1014, %v1013
    %v1041 = vpack.c.b16 %v1016, %v1015
    %v1042 = vpack.c.b16 %v1018, %v1017
    %v1043 = vpack.c.b16 %v1020, %v1019
    %v1044 = vpack.c.b16 %v1022, %v1021
    %v1045 = vpack.c.b16 %v1024, %v1023
    %v1046 = vpack.c.b16 %v1026, %v1025
    %v1047 = vpack.c.b16 %v1028, %v1027
    %v1048 = vpack.c.b16 %v1030, %v1029
    %v1049 = vpack.c.b16 %v1032, %v1031
    %v1050 = vpack.c.b16 %v1034, %v1033
    %v1099 = vunpack.c.l.b16 %v931
    %v1100 = vunpack.c.h.b16 %v931
    %v1101 = vunpack.c.l.b16 %v932
    %v1102 = vunpack.c.l.b16 %v933
    %v1103 = vunpack.c.h.b16 %v933
    %v1104 = vunpack.c.l.b16 %v934
    %v1105 = vunpack.c.l.b16 %v935
    %v1106 = vunpack.c.h.b16 %v935
    %v1107 = vunpack.c.l.b16 %v936
    %v1108 = vunpack.c.l.b16 %v937
    %v1109 = vunpack.c.h.b16 %v937
    %v1110 = vunpack.c.l.b16 %v938
    %v1111 = vunpack.c.l.b16 %v939
    %v1112 = vunpack.c.h.b16 %v939
    %v1113 = vunpack.c.l.b16 %v940
    %v1114 = vunpack.c.l.b16 %v941
    %v1115 = vunpack.c.h.b16 %v941
    %v1116 = vunpack.c.l.b16 %v942
    %v1117 = vunpack.c.l.b16 %v943
    %v1118 = vunpack.c.h.b16 %v943
    %v1119 = vunpack.c.l.b16 %v944
    %v1120 = vunpack.c.l.b16 %v945
    %v1121 = vunpack.c.h.b16 %v945
    %v1122 = vunpack.c.l.b16 %v946
    %v1123 = vunpack.c.l.b16 %v947
    %v1124 = vunpack.c.h.b16 %v947
    %v1125 = vunpack.c.l.b16 %v948
    %v1126 = vunpack.c.l.b16 %v949
    %v1127 = vunpack.c.h.b16 %v949
    %v1128 = vunpack.c.l.b16 %v950
    %v1129 = vunpack.c.l.b16 %v951
    %v1130 = vunpack.c.h.b16 %v951
    %v1131 = vunpack.c.l.b16 %v952
    %v1132 = vunpack.c.l.b16 %v953
    %v1133 = vunpack.c.h.b16 %v953
    %v1134 = vunpack.c.l.b16 %v954
    %v1135 = vunpack.c.l.b16 %v955
    %v1136 = vunpack.c.h.b16 %v955
    %v1137 = vunpack.c.l.b16 %v956
    %v1138 = vunpack.c.l.b16 %v957
    %v1139 = vunpack.c.h.b16 %v957
    %v1140 = vunpack.c.l.b16 %v958
    %v1141 = vunpack.c.l.b16 %v959
    %v1142 = vunpack.c.h.b16 %v959
    %v1143 = vunpack.c.l.b16 %v960
    %v1144 = vunpack.c.l.b16 %v961
    %v1145 = vunpack.c.h.b16 %v961
    %v1146 = vunpack.c.l.b16 %v962
    %v1147 = vpack.c.b16 %v1102, %v1099
    %v1148 = vpack.c.b16 %v1103, %v1100
    %v1149 = vpack.c.b16 %v1104, %v1101
    %v1150 = vpack.c.b16 %v1108, %v1105
    %v1151 = vpack.c.b16 %v1109, %v1106
    %v1152 = vpack.c.b16 %v1110, %v1107
    %v1153 = vpack.c.b16 %v1114, %v1111
    %v1154 = vpack.c.b16 %v1115, %v1112
    %v1155 = vpack.c.b16 %v1116, %v1113
    %v1156 = vpack.c.b16 %v1120, %v1117
    %v1157 = vpack.c.b16 %v1121, %v1118
    %v1158 = vpack.c.b16 %v1122, %v1119
    %v1159 = vpack.c.b16 %v1126, %v1123
    %v1160 = vpack.c.b16 %v1127, %v1124
    %v1161 = vpack.c.b16 %v1128, %v1125
    %v1162 = vpack.c.b16 %v1132, %v1129
    %v1163 = vpack.c.b16 %v1133, %v1130
    %v1164 = vpack.c.b16 %v1134, %v1131
    %v1165 = vpack.c.b16 %v1138, %v1135
    %v1166 = vpack.c.b16 %v1139, %v1136
    %v1167 = vpack.c.b16 %v1140, %v1137
    %v1168 = vpack.c.b16 %v1144, %v1141
    %v1169 = vpack.c.b16 %v1145, %v1142
    %v1170 = vpack.c.b16 %v1146, %v1143
    %1195 = vmatpush.bf16.msra.mxu0 %v1168
    %1196 = vmatpush.bf16.msra.mxu0 %v1165
    %1197 = vmatpush.bf16.msra.mxu0 %v1162
    %1198 = vmatpush.bf16.msra.mxu0 %v1159
    %1199 = vmatpush.bf16.msra.mxu0 %v1156
    %1200 = vmatpush.bf16.msra.mxu0 %v1153
    %1201 = vmatpush.bf16.msra.mxu0 %v1150
    %1202 = vmatpush.bf16.msra.mxu0 %v1147
    %1203 = vmatmul.bf16.gmra.mxu0 %v1035
    %v1204 = vpop.f32.mrf.mxu0
    %v1205 = vadd.f32 %v965, %v1204
    %v1206 = vpop.f32.mrf.mxu0
    %v1207 = vadd.f32 %v965, %v1206
    %1208 = vmatmul.bf16.gmra.mxu0 %v1036
    %v1209 = vpop.f32.mrf.mxu0
    %v1210 = vadd.f32 %v965, %v1209
    %v1211 = vpop.f32.mrf.mxu0
    %v1212 = vadd.f32 %v965, %v1211
    %1213 = vmatmul.bf16.gmra.mxu0 %v1037
    %v1214 = vpop.f32.mrf.mxu0
    %v1215 = vadd.f32 %v965, %v1214
    %v1216 = vpop.f32.mrf.mxu0
    %v1217 = vadd.f32 %v965, %v1216
    %1218 = vmatmul.bf16.gmra.mxu0 %v1038
    %v1219 = vpop.f32.mrf.mxu0
    %v1220 = vadd.f32 %v965, %v1219
    %v1221 = vpop.f32.mrf.mxu0
    %v1222 = vadd.f32 %v965, %v1221
    %1223 = vmatmul.bf16.gmra.mxu0 %v1039
    %v1224 = vpop.f32.mrf.mxu0
    %v1225 = vadd.f32 %v965, %v1224
    %v1226 = vpop.f32.mrf.mxu0
    %v1227 = vadd.f32 %v965, %v1226
    %1228 = vmatmul.bf16.gmra.mxu0 %v1040
    %v1229 = vpop.f32.mrf.mxu0
    %v1230 = vadd.f32 %v965, %v1229
    %v1231 = vpop.f32.mrf.mxu0
    %v1232 = vadd.f32 %v965, %v1231
    %1233 = vmatmul.bf16.gmra.mxu0 %v1041
    %v1234 = vpop.f32.mrf.mxu0
    %v1235 = vadd.f32 %v965, %v1234
    %v1236 = vpop.f32.mrf.mxu0
    %v1237 = vadd.f32 %v965, %v1236
    %1238 = vmatmul.bf16.gmra.mxu0 %v1042
    %v1239 = vpop.f32.mrf.mxu0
    %v1240 = vadd.f32 %v965, %v1239
    %v1241 = vpop.f32.mrf.mxu0
    %v1242 = vadd.f32 %v965, %v1241
    %1243 = vmatmul.bf16.gmra.mxu0 %v1043
    %v1244 = vpop.f32.mrf.mxu0
    %v1245 = vadd.f32 %v965, %v1244
    %v1246 = vpop.f32.mrf.mxu0
    %v1247 = vadd.f32 %v965, %v1246
    %1248 = vmatmul.bf16.gmra.mxu0 %v1044
    %v1249 = vpop.f32.mrf.mxu0
    %v1250 = vadd.f32 %v965, %v1249
    %v1251 = vpop.f32.mrf.mxu0
    %v1252 = vadd.f32 %v965, %v1251
    %1253 = vmatmul.bf16.gmra.mxu0 %v1045
    %v1254 = vpop.f32.mrf.mxu0
    %v1255 = vadd.f32 %v965, %v1254
    %v1256 = vpop.f32.mrf.mxu0
    %v1257 = vadd.f32 %v965, %v1256
    %1258 = vmatmul.bf16.gmra.mxu0 %v1046
    %v1259 = vpop.f32.mrf.mxu0
    %v1260 = vadd.f32 %v965, %v1259
    %v1261 = vpop.f32.mrf.mxu0
    %v1262 = vadd.f32 %v965, %v1261
    %1263 = vmatmul.bf16.gmra.mxu0 %v1047
    %v1264 = vpop.f32.mrf.mxu0
    %v1265 = vadd.f32 %v965, %v1264
    %v1266 = vpop.f32.mrf.mxu0
    %v1267 = vadd.f32 %v965, %v1266
    %1268 = vmatmul.bf16.gmra.mxu0 %v1048
    %v1269 = vpop.f32.mrf.mxu0
    %v1270 = vadd.f32 %v965, %v1269
    %v1271 = vpop.f32.mrf.mxu0
    %v1272 = vadd.f32 %v965, %v1271
    %1273 = vmatmul.bf16.gmra.mxu0 %v1049
    %v1274 = vpop.f32.mrf.mxu0
    %v1275 = vadd.f32 %v965, %v1274
    %v1276 = vpop.f32.mrf.mxu0
    %v1277 = vadd.f32 %v965, %v1276
    %1278 = vmatmul.bf16.gmra.mxu0 %v1050
    %v1279 = vpop.f32.mrf.mxu0
    %v1280 = vadd.f32 %v965, %v1279
    %v1281 = vpop.f32.mrf.mxu0
    %v1282 = vadd.f32 %v965, %v1281
    %1283 = vdwg.mxu0
    %1284 = vmatpush.bf16.msra.mxu0 %v1169
    %1285 = vmatpush.bf16.msra.mxu0 %v1166
    %1286 = vmatpush.bf16.msra.mxu0 %v1163
    %1287 = vmatpush.bf16.msra.mxu0 %v1160
    %1288 = vmatpush.bf16.msra.mxu0 %v1157
    %1289 = vmatpush.bf16.msra.mxu0 %v1154
    %1290 = vmatpush.bf16.msra.mxu0 %v1151
    %1291 = vmatpush.bf16.msra.mxu0 %v1148
    %1292 = vmatmul.bf16.gmra.mxu0 %v1035
    %v1293 = vpop.f32.mrf.mxu0
    %v1294 = vadd.f32 %v966, %v1293
    %v1295 = vpop.f32.mrf.mxu0
    %v1296 = vadd.f32 %v966, %v1295
    %1297 = vmatmul.bf16.gmra.mxu0 %v1036
    %v1298 = vpop.f32.mrf.mxu0
    %v1299 = vadd.f32 %v966, %v1298
    %v1300 = vpop.f32.mrf.mxu0
    %v1301 = vadd.f32 %v966, %v1300
    %1302 = vmatmul.bf16.gmra.mxu0 %v1037
    %v1303 = vpop.f32.mrf.mxu0
    %v1304 = vadd.f32 %v966, %v1303
    %v1305 = vpop.f32.mrf.mxu0
    %v1306 = vadd.f32 %v966, %v1305
    %1307 = vmatmul.bf16.gmra.mxu0 %v1038
    %v1308 = vpop.f32.mrf.mxu0
    %v1309 = vadd.f32 %v966, %v1308
    %v1310 = vpop.f32.mrf.mxu0
    %v1311 = vadd.f32 %v966, %v1310
    %1312 = vmatmul.bf16.gmra.mxu0 %v1039
    %v1313 = vpop.f32.mrf.mxu0
    %v1314 = vadd.f32 %v966, %v1313
    %v1315 = vpop.f32.mrf.mxu0
    %v1316 = vadd.f32 %v966, %v1315
    %1317 = vmatmul.bf16.gmra.mxu0 %v1040
    %v1318 = vpop.f32.mrf.mxu0
    %v1319 = vadd.f32 %v966, %v1318
    %v1320 = vpop.f32.mrf.mxu0
    %v1321 = vadd.f32 %v966, %v1320
    %1322 = vmatmul.bf16.gmra.mxu0 %v1041
    %v1323 = vpop.f32.mrf.mxu0
    %v1324 = vadd.f32 %v966, %v1323
    %v1325 = vpop.f32.mrf.mxu0
    %v1326 = vadd.f32 %v966, %v1325
    %1327 = vmatmul.bf16.gmra.mxu0 %v1042
    %v1328 = vpop.f32.mrf.mxu0
    %v1329 = vadd.f32 %v966, %v1328
    %v1330 = vpop.f32.mrf.mxu0
    %v1331 = vadd.f32 %v966, %v1330
    %1332 = vmatmul.bf16.gmra.mxu0 %v1043
    %v1333 = vpop.f32.mrf.mxu0
    %v1334 = vadd.f32 %v966, %v1333
    %v1335 = vpop.f32.mrf.mxu0
    %v1336 = vadd.f32 %v966, %v1335
    %1337 = vmatmul.bf16.gmra.mxu0 %v1044
    %v1338 = vpop.f32.mrf.mxu0
    %v1339 = vadd.f32 %v966, %v1338
    %v1340 = vpop.f32.mrf.mxu0
    %v1341 = vadd.f32 %v966, %v1340
    %1342 = vmatmul.bf16.gmra.mxu0 %v1045
    %v1343 = vpop.f32.mrf.mxu0
    %v1344 = vadd.f32 %v966, %v1343
    %v1345 = vpop.f32.mrf.mxu0
    %v1346 = vadd.f32 %v966, %v1345
    %1347 = vmatmul.bf16.gmra.mxu0 %v1046
    %v1348 = vpop.f32.mrf.mxu0
    %v1349 = vadd.f32 %v966, %v1348
    %v1350 = vpop.f32.mrf.mxu0
    %v1351 = vadd.f32 %v966, %v1350
    %1352 = vmatmul.bf16.gmra.mxu0 %v1047
    %v1353 = vpop.f32.mrf.mxu0
    %v1354 = vadd.f32 %v966, %v1353
    %v1355 = vpop.f32.mrf.mxu0
    %v1356 = vadd.f32 %v966, %v1355
    %1357 = vmatmul.bf16.gmra.mxu0 %v1048
    %v1358 = vpop.f32.mrf.mxu0
    %v1359 = vadd.f32 %v966, %v1358
    %v1360 = vpop.f32.mrf.mxu0
    %v1361 = vadd.f32 %v966, %v1360
    %1362 = vmatmul.bf16.gmra.mxu0 %v1049
    %v1363 = vpop.f32.mrf.mxu0
    %v1364 = vadd.f32 %v966, %v1363
    %v1365 = vpop.f32.mrf.mxu0
    %v1366 = vadd.f32 %v966, %v1365
    %1367 = vmatmul.bf16.gmra.mxu0 %v1050
    %v1368 = vpop.f32.mrf.mxu0
    %v1369 = vadd.f32 %v966, %v1368
    %v1370 = vpop.f32.mrf.mxu0
    %v1371 = vadd.f32 %v966, %v1370
    %1372 = vdwg.mxu0
    %1373 = vmatpush.bf16.msra.mxu0 %v1170
    %1374 = vmatpush.bf16.msra.mxu0 %v1167
    %1375 = vmatpush.bf16.msra.mxu0 %v1164
    %1376 = vmatpush.bf16.msra.mxu0 %v1161
    %1377 = vmatpush.bf16.msra.mxu0 %v1158
    %1378 = vmatpush.bf16.msra.mxu0 %v1155
    %1379 = vmatpush.bf16.msra.mxu0 %v1152
    %1380 = vmatpush.bf16.msra.mxu0 %v1149
    %1381 = vmatmul.bf16.gmra.mxu0 %v1035
    %v1382 = vpop.f32.mrf.mxu0
    %v1383 = vadd.f32 %v967, %v1382
    %v1384 = vpop.f32.mrf.mxu0
    %v1385 = vadd.f32 %v967, %v1384
    %1386 = vmatmul.bf16.gmra.mxu0 %v1036
    %v1387 = vpop.f32.mrf.mxu0
    %v1388 = vadd.f32 %v967, %v1387
    %v1389 = vpop.f32.mrf.mxu0
    %v1390 = vadd.f32 %v967, %v1389
    %1391 = vmatmul.bf16.gmra.mxu0 %v1037
    %v1392 = vpop.f32.mrf.mxu0
    %v1393 = vadd.f32 %v967, %v1392
    %v1394 = vpop.f32.mrf.mxu0
    %v1395 = vadd.f32 %v967, %v1394
    %1396 = vmatmul.bf16.gmra.mxu0 %v1038
    %v1397 = vpop.f32.mrf.mxu0
    %v1398 = vadd.f32 %v967, %v1397
    %v1399 = vpop.f32.mrf.mxu0
    %v1400 = vadd.f32 %v967, %v1399
    %1401 = vmatmul.bf16.gmra.mxu0 %v1039
    %v1402 = vpop.f32.mrf.mxu0
    %v1403 = vadd.f32 %v967, %v1402
    %v1404 = vpop.f32.mrf.mxu0
    %v1405 = vadd.f32 %v967, %v1404
    %1406 = vmatmul.bf16.gmra.mxu0 %v1040
    %v1407 = vpop.f32.mrf.mxu0
    %v1408 = vadd.f32 %v967, %v1407
    %v1409 = vpop.f32.mrf.mxu0
    %v1410 = vadd.f32 %v967, %v1409
    %1411 = vmatmul.bf16.gmra.mxu0 %v1041
    %v1412 = vpop.f32.mrf.mxu0
    %v1413 = vadd.f32 %v967, %v1412
    %v1414 = vpop.f32.mrf.mxu0
    %v1415 = vadd.f32 %v967, %v1414
    %1416 = vmatmul.bf16.gmra.mxu0 %v1042
    %v1417 = vpop.f32.mrf.mxu0
    %v1418 = vadd.f32 %v967, %v1417
    %v1419 = vpop.f32.mrf.mxu0
    %v1420 = vadd.f32 %v967, %v1419
    %1421 = vmatmul.bf16.gmra.mxu0 %v1043
    %v1422 = vpop.f32.mrf.mxu0
    %v1423 = vadd.f32 %v967, %v1422
    %v1424 = vpop.f32.mrf.mxu0
    %v1425 = vadd.f32 %v967, %v1424
    %1426 = vmatmul.bf16.gmra.mxu0 %v1044
    %v1427 = vpop.f32.mrf.mxu0
    %v1428 = vadd.f32 %v967, %v1427
    %v1429 = vpop.f32.mrf.mxu0
    %v1430 = vadd.f32 %v967, %v1429
    %1431 = vmatmul.bf16.gmra.mxu0 %v1045
    %v1432 = vpop.f32.mrf.mxu0
    %v1433 = vadd.f32 %v967, %v1432
    %v1434 = vpop.f32.mrf.mxu0
    %v1435 = vadd.f32 %v967, %v1434
    %1436 = vmatmul.bf16.gmra.mxu0 %v1046
    %v1437 = vpop.f32.mrf.mxu0
    %v1438 = vadd.f32 %v967, %v1437
    %v1439 = vpop.f32.mrf.mxu0
    %v1440 = vadd.f32 %v967, %v1439
    %1441 = vmatmul.bf16.gmra.mxu0 %v1047
    %v1442 = vpop.f32.mrf.mxu0
    %v1443 = vadd.f32 %v967, %v1442
    %v1444 = vpop.f32.mrf.mxu0
    %v1445 = vadd.f32 %v967, %v1444
    %1446 = vmatmul.bf16.gmra.mxu0 %v1048
    %v1447 = vpop.f32.mrf.mxu0
    %v1448 = vadd.f32 %v967, %v1447
    %v1449 = vpop.f32.mrf.mxu0
    %v1450 = vadd.f32 %v967, %v1449
    %1451 = vmatmul.bf16.gmra.mxu0 %v1049
    %v1452 = vpop.f32.mrf.mxu0
    %v1453 = vadd.f32 %v967, %v1452
    %v1454 = vpop.f32.mrf.mxu0
    %v1455 = vadd.f32 %v967, %v1454
    %1456 = vmatmul.bf16.gmra.mxu0 %v1050
    %v1457 = vpop.f32.mrf.mxu0
    %v1458 = vadd.f32 %v967, %v1457
    %v1459 = vpop.f32.mrf.mxu0
    %v1460 = vadd.f32 %v967, %v1459
    %1461 = vdwg.mxu0
    %v1462 = vpack.c.bf16 %v1294, %v1205
    %v1463 = vpack.c.bf16 %v1383, %v1383
    %v1464 = vpack.c.bf16 %v1296, %v1207
    %v1465 = vpack.c.bf16 %v1385, %v1385
    %v1466 = vpack.c.bf16 %v1299, %v1210
    %v1467 = vpack.c.bf16 %v1388, %v1388
    %v1468 = vpack.c.bf16 %v1301, %v1212
    %v1469 = vpack.c.bf16 %v1390, %v1390
    %v1470 = vpack.c.bf16 %v1304, %v1215
    %v1471 = vpack.c.bf16 %v1393, %v1393
    %v1472 = vpack.c.bf16 %v1306, %v1217
    %v1473 = vpack.c.bf16 %v1395, %v1395
    %v1474 = vpack.c.bf16 %v1309, %v1220
    %v1475 = vpack.c.bf16 %v1398, %v1398
    %v1476 = vpack.c.bf16 %v1311, %v1222
    %v1477 = vpack.c.bf16 %v1400, %v1400
    %v1478 = vpack.c.bf16 %v1314, %v1225
    %v1479 = vpack.c.bf16 %v1403, %v1403
    %v1480 = vpack.c.bf16 %v1316, %v1227
    %v1481 = vpack.c.bf16 %v1405, %v1405
    %v1482 = vpack.c.bf16 %v1319, %v1230
    %v1483 = vpack.c.bf16 %v1408, %v1408
    %v1484 = vpack.c.bf16 %v1321, %v1232
    %v1485 = vpack.c.bf16 %v1410, %v1410
    %v1486 = vpack.c.bf16 %v1324, %v1235
    %v1487 = vpack.c.bf16 %v1413, %v1413
    %v1488 = vpack.c.bf16 %v1326, %v1237
    %v1489 = vpack.c.bf16 %v1415, %v1415
    %v1490 = vpack.c.bf16 %v1329, %v1240
    %v1491 = vpack.c.bf16 %v1418, %v1418
    %v1492 = vpack.c.bf16 %v1331, %v1242
    %v1493 = vpack.c.bf16 %v1420, %v1420
    %v1494 = vpack.c.bf16 %v1334, %v1245
    %v1495 = vpack.c.bf16 %v1423, %v1423
    %v1496 = vpack.c.bf16 %v1336, %v1247
    %v1497 = vpack.c.bf16 %v1425, %v1425
    %v1498 = vpack.c.bf16 %v1339, %v1250
    %v1499 = vpack.c.bf16 %v1428, %v1428
    %v1500 = vpack.c.bf16 %v1341, %v1252
    %v1501 = vpack.c.bf16 %v1430, %v1430
    %v1502 = vpack.c.bf16 %v1344, %v1255
    %v1503 = vpack.c.bf16 %v1433, %v1433
    %v1504 = vpack.c.bf16 %v1346, %v1257
    %v1505 = vpack.c.bf16 %v1435, %v1435
    %v1506 = vpack.c.bf16 %v1349, %v1260
    %v1507 = vpack.c.bf16 %v1438, %v1438
    %v1508 = vpack.c.bf16 %v1351, %v1262
    %v1509 = vpack.c.bf16 %v1440, %v1440
    %v1510 = vpack.c.bf16 %v1354, %v1265
    %v1511 = vpack.c.bf16 %v1443, %v1443
    %v1512 = vpack.c.bf16 %v1356, %v1267
    %v1513 = vpack.c.bf16 %v1445, %v1445
    %v1514 = vpack.c.bf16 %v1359, %v1270
    %v1515 = vpack.c.bf16 %v1448, %v1448
    %v1516 = vpack.c.bf16 %v1361, %v1272
    %v1517 = vpack.c.bf16 %v1450, %v1450
    %v1518 = vpack.c.bf16 %v1364, %v1275
    %v1519 = vpack.c.bf16 %v1453, %v1453
    %v1520 = vpack.c.bf16 %v1366, %v1277
    %v1521 = vpack.c.bf16 %v1455, %v1455
    %v1522 = vpack.c.bf16 %v1369, %v1280
    %v1523 = vpack.c.bf16 %v1458, %v1458
    %v1524 = vpack.c.bf16 %v1371, %v1282
    %v1525 = vpack.c.bf16 %v1460, %v1460
    %1526 = vst [vmem:[#allocation11] sm:$0xff] %v1462
    %1527 = vst [vmem:[#allocation11 + $0x8] sm:$0xf] %v1463
    %1528 = vst [vmem:[#allocation11 + $0xc] sm:$0xff] %v1464
    %1529 = vst [vmem:[#allocation11 + $0x14] sm:$0xf] %v1465
    %1530 = vst [vmem:[#allocation11 + $0x18] sm:$0xff] %v1466
    %1531 = vst [vmem:[#allocation11 + $0x20] sm:$0xf] %v1467
    %1532 = vst [vmem:[#allocation11 + $0x24] sm:$0xff] %v1468
    %1533 = vst [vmem:[#allocation11 + $0x2c] sm:$0xf] %v1469
    %1534 = vst [vmem:[#allocation11 + $0x30] sm:$0xff] %v1470
    %1535 = vst [vmem:[#allocation11 + $0x38] sm:$0xf] %v1471
    %1536 = vst [vmem:[#allocation11 + $0x3c] sm:$0xff] %v1472
    %1537 = vst [vmem:[#allocation11 + $0x44] sm:$0xf] %v1473
    %1538 = vst [vmem:[#allocation11 + $0x48] sm:$0xff] %v1474
    %1539 = vst [vmem:[#allocation11 + $0x50] sm:$0xf] %v1475
    %1540 = vst [vmem:[#allocation11 + $0x54] sm:$0xff] %v1476
    %1541 = vst [vmem:[#allocation11 + $0x5c] sm:$0xf] %v1477
    %1542 = vst [vmem:[#allocation11 + $0x60] sm:$0xff] %v1478
    %1543 = vst [vmem:[#allocation11 + $0x68] sm:$0xf] %v1479
    %1544 = vst [vmem:[#allocation11 + $0x6c] sm:$0xff] %v1480
    %1545 = vst [vmem:[#allocation11 + $0x74] sm:$0xf] %v1481
    %1546 = vst [vmem:[#allocation11 + $0x78] sm:$0xff] %v1482
    %1547 = vst [vmem:[#allocation11 + $0x80] sm:$0xf] %v1483
    %1548 = vst [vmem:[#allocation11 + $0x84] sm:$0xff] %v1484
    %1549 = vst [vmem:[#allocation11 + $0x8c] sm:$0xf] %v1485
    %1550 = vst [vmem:[#allocation11 + $0x90] sm:$0xff] %v1486
    %1551 = vst [vmem:[#allocation11 + $0x98] sm:$0xf] %v1487
    %1552 = vst [vmem:[#allocation11 + $0x9c] sm:$0xff] %v1488
    %1553 = vst [vmem:[#allocation11 + $0xa4] sm:$0xf] %v1489
    %1554 = vst [vmem:[#allocation11 + $0xa8] sm:$0xff] %v1490
    %1555 = vst [vmem:[#allocation11 + $0xb0] sm:$0xf] %v1491
    %1556 = vst [vmem:[#allocation11 + $0xb4] sm:$0xff] %v1492
    %1557 = vst [vmem:[#allocation11 + $0xbc] sm:$0xf] %v1493
    %1558 = vst [vmem:[#allocation11 + $0xc0] sm:$0xff] %v1494
    %1559 = vst [vmem:[#allocation11 + $0xc8] sm:$0xf] %v1495
    %1560 = vst [vmem:[#allocation11 + $0xcc] sm:$0xff] %v1496
    %1561 = vst [vmem:[#allocation11 + $0xd4] sm:$0xf] %v1497
    %1562 = vst [vmem:[#allocation11 + $0xd8] sm:$0xff] %v1498
    %1563 = vst [vmem:[#allocation11 + $0xe0] sm:$0xf] %v1499
    %1564 = vst [vmem:[#allocation11 + $0xe4] sm:$0xff] %v1500
    %1565 = vst [vmem:[#allocation11 + $0xec] sm:$0xf] %v1501
    %1566 = vst [vmem:[#allocation11 + $0xf0] sm:$0xff] %v1502
    %1567 = vst [vmem:[#allocation11 + $0xf8] sm:$0xf] %v1503
    %1568 = vst [vmem:[#allocation11 + $0xfc] sm:$0xff] %v1504
    %1569 = vst [vmem:[#allocation11 + $0x104] sm:$0xf] %v1505
    %1570 = vst [vmem:[#allocation11 + $0x108] sm:$0xff] %v1506
    %1571 = vst [vmem:[#allocation11 + $0x110] sm:$0xf] %v1507
    %1572 = vst [vmem:[#allocation11 + $0x114] sm:$0xff] %v1508
    %1573 = vst [vmem:[#allocation11 + $0x11c] sm:$0xf] %v1509
    %1574 = vst [vmem:[#allocation11 + $0x120] sm:$0xff] %v1510
    %1575 = vst [vmem:[#allocation11 + $0x128] sm:$0xf] %v1511
    %1576 = vst [vmem:[#allocation11 + $0x12c] sm:$0xff] %v1512
    %1577 = vst [vmem:[#allocation11 + $0x134] sm:$0xf] %v1513
    %1578 = vst [vmem:[#allocation11 + $0x138] sm:$0xff] %v1514
    %1579 = vst [vmem:[#allocation11 + $0x140] sm:$0xf] %v1515
    %1580 = vst [vmem:[#allocation11 + $0x144] sm:$0xff] %v1516
    %1581 = vst [vmem:[#allocation11 + $0x14c] sm:$0xf] %v1517
    %1582 = vst [vmem:[#allocation11 + $0x150] sm:$0xff] %v1518
    %1583 = vst [vmem:[#allocation11 + $0x158] sm:$0xf] %v1519
    %1584 = vst [vmem:[#allocation11 + $0x15c] sm:$0xff] %v1520
    %1585 = vst [vmem:[#allocation11 + $0x164] sm:$0xf] %v1521
    %1586 = vst [vmem:[#allocation11 + $0x168] sm:$0xff] %v1522
    %1587 = vst [vmem:[#allocation11 + $0x170] sm:$0xf] %v1523
    %1588 = vst [vmem:[#allocation11 + $0x174] sm:$0xff] %v1524
    %1589 = vst [vmem:[#allocation11 + $0x17c] sm:$0xf] %v1525
    // Predicated region
    $region42: #{tpu_custom_call.1} parent=1 // pred_check
      _
    $region43: #{tpu_custom_call.1} parent=1 // pred_check_branch
      %1591 = sbr.rel (0) target = $region45
    $region44: #{tpu_custom_call.1} parent=1 // pred_region
      %1593 = vsyncadd [#allocation5], 0
      %s1594 = sshll.u32 [#allocation11], 4
      %s1595 = int_to_ptr.vmem [resolvable:$true] %s1594
      %s1596 = sshll.u32 %s5, 4
      %s1597 = int_to_ptr.hbm [resolvable:$true] %s1596
      %1602 = dma.vmem_to_hbm [thread:$0]  %s1595, 6144, %s1597, [#allocation5], 192, 192, 12
    $region45: #{tpu_custom_call.1} parent=1 // pred_fallthru
      _
    // Predicated region
    $region46: #{tpu_custom_call.1} parent=1 // pred_check
      _
    $region47: #{tpu_custom_call.1} parent=1 // pred_check_branch
      %1604 = sbr.rel (0) target = $region49
    $region48: #{tpu_custom_call.1} parent=1 // pred_region
      %1606 = dma.done [#allocation5], 6144
    $region49: #{tpu_custom_call.1} parent=1 // pred_fallthru
      _
    %1607 = vsyncpa [#allocation4], 1
    %1608 = vsyncpa [#allocation7], 1
    %1609 = vsyncpa [#allocation10], 1
    %1610 = vsyncpa [#allocation5], 1

</llo_original>
